<compile_context>
chip_gen: v6e
topology: v6e:2x2x1
jax: 0.10.0
libtpu: 0.0.40
codegen_flags: <defaults>
</compile_context>

<pallas_src>
import functools

import jax
import jax.numpy as jnp
from jax.experimental import pallas as pl
from jax.experimental.pallas import tpu as pltpu

IN_DIM = 512
HID_DIM = 512
OUT_DIM = 2
OUT_PAD = 128  # lane-dense padded fc2 output width (unmasked full-lane vst)


def _round_up(x, m):
    return (x + m - 1) // m * m


def _discriminator_kernel(x_ref, w1_ref, b1_ref, w2_ref, b2_ref, o_ref):
    # x_ref : (TB, 512)    f32/bf16 VMEM (feature tile)
    # w1_ref: (512, 512)   bf16 VMEM (fc1 weight, [in, out], resident)
    # b1_ref: (1, 512)     f32  VMEM
    # w2_ref: (512, 128)   bf16 VMEM (fc2 weight, [in, out], zero-padded)
    # b2_ref: (1, 128)     f32  VMEM (zero-padded)
    # o_ref : (TB, 128)    bf16 VMEM (lane-dense padded logits)

    # Gradient-reverse layer is identity in the forward pass.
    # fc1 + ReLU: bf16 MXU matmul with f32 accumulation, f32 epilogue.
    x = x_ref[...].astype(jnp.bfloat16)   # no-op if the producer feeds bf16
    h = jnp.dot(x, w1_ref[...], preferred_element_type=jnp.float32)
    h = jnp.maximum(h + b1_ref[...], 0.0)

    # TODO(synk): Dropout(0.5) is eval-mode identity (no in-kernel RNG mask).

    # fc2: bf16 inputs, f32 accumulation, lane-dense 128-wide bf16 store.
    out = jnp.dot(h.astype(jnp.bfloat16), w2_ref[...],
                  preferred_element_type=jnp.float32)
    o_ref[...] = (out + b2_ref[...]).astype(o_ref.dtype)


def prepare_params(w1, b1, w2, b2):
    """One-time weight prep, hoisted out of the per-call hot path.

    w1: [512, 512] fc1 weight already transposed to [in, out]
    b1: [512]
    w2: [512, 2]   fc2 weight already transposed to [in, out]
    b2: [2]
    Returns bf16 weights + f32 biases with the fc2 path zero-padded to 128
    output lanes (lane-dense store in the kernel).
    """
    w1_bf = jnp.asarray(w1, jnp.bfloat16)
    b1_2d = jnp.asarray(b1, jnp.float32).reshape(1, HID_DIM)
    w2_pad = jnp.zeros((HID_DIM, OUT_PAD), jnp.bfloat16)
    w2_pad = w2_pad.at[:, :OUT_DIM].set(jnp.asarray(w2, jnp.bfloat16))
    b2_pad = jnp.zeros((1, OUT_PAD), jnp.float32)
    b2_pad = b2_pad.at[:, :OUT_DIM].set(
        jnp.asarray(b2, jnp.float32).reshape(1, OUT_DIM))
    return w1_bf, b1_2d, w2_pad, b2_pad


def _resident_spec(shape, single_buffer):
    # Constant (0, 0) index map keeps the operand VMEM-resident across grid
    # steps.  Optionally single-buffer it (default double-buffering keeps a
    # dead second ~0.65 MiB copy of the weights) via per-BlockSpec
    # pipeline_mode; off by default for maximum portability.
    if single_buffer:
        return pl.BlockSpec(shape, lambda i: (0, 0),
                            pipeline_mode=pl.Buffered(1))
    return pl.BlockSpec(shape, lambda i: (0, 0))


@functools.partial(
    jax.jit,
    static_argnames=("block_b", "min_grid_steps", "single_buffer_weights"))
def discriminator_forward(feature, lambda_term, w1_bf, b1_2d, w2_pad, b2_pad,
                          *, block_b=1024, min_grid_steps=1,
                          single_buffer_weights=False):
    """feature: [B, 512] f32 (or bf16 straight from the backbone).
    Params must come from prepare_params().  Returns [B, 2] f32 logits.

    min_grid_steps=2 on v7x ensures the parallel batch axis is split across
    both TensorCores; leave at 1 on v5e/v6e (single TC).
    """
    del lambda_term  # gradient-reverse layer is identity in forward
    B = feature.shape[0]

    # Batch tile: as large as block_b allows (amortizes the ~0.35 us per-step
    # Pallas overhead), 128-row aligned; pad the batch to a tile multiple.
    tb = min(block_b, _round_up(B, 128))
    if min_grid_steps > 1:
        # Megacore (v7x): force >= min_grid_steps grid steps so the "parallel"
        # batch axis actually shards across cores (no-op when B <= 128).
        tb = min(tb, max(128, _round_up(
            pl.cdiv(_round_up(B, 128), min_grid_steps), 128)))
    Bp = _round_up(B, tb)
    x = feature if Bp == B else jnp.pad(feature, ((0, Bp - B), (0, 0)))

    grid = (Bp // tb,)
    out = pl.pallas_call(
        _discriminator_kernel,
        out_shape=jax.ShapeDtypeStruct((Bp, OUT_PAD), jnp.bfloat16),
        grid=grid,
        in_specs=[
            pl.BlockSpec((tb, IN_DIM), lambda i: (i, 0)),              # x tile
            _resident_spec((IN_DIM, HID_DIM), single_buffer_weights),  # W1
            _resident_spec((1, HID_DIM), single_buffer_weights),       # b1
            _resident_spec((HID_DIM, OUT_PAD), single_buffer_weights), # W2
            _resident_spec((1, OUT_PAD), single_buffer_weights),       # b2
        ],
        out_specs=pl.BlockSpec((tb, OUT_PAD), lambda i: (i, 0)),
        compiler_params=pltpu.CompilerParams(
            dimension_semantics=("parallel",)),
    )(x, w1_bf, b1_2d, w2_pad, b2_pad)

    # Strip batch padding / zero lanes; upcast the (f32-accumulated,
    # bf16-stored) logits back to f32 to match the PyTorch output dtype.
    return out[:B, :OUT_DIM].astype(jnp.float32)


def init_params(key):
    """Deterministic parameter init mirroring the PyTorch __init__."""
    k1, k2 = jax.random.split(key)
    # fc1.weight ~ N(0, 0.01), stored transposed as [in, out]; bias = 0
    w1 = jax.random.normal(k1, (IN_DIM, HID_DIM), jnp.float32) * 0.01
    b1 = jnp.zeros((HID_DIM,), jnp.float32)
    # fc2.weight ~ N(0, 0.3), stored transposed as [in, out]; bias = 0
    w2 = jax.random.normal(k2, (HID_DIM, OUT_DIM), jnp.float32) * 0.3
    b2 = jnp.zeros((OUT_DIM,), jnp.float32)
    return w1, b1, w2, b2


def _default_min_grid_steps():
    # v7x has 2 TensorCores per chip -> keep >= 2 grid steps there; v5e/v6e
    # have a single TC, so 1 step is fine.
    try:
        kind = jax.devices()[0].device_kind.lower()
    except Exception:
        return 1
    return 2 if "v7" in kind else 1


if __name__ == "__main__":
    key = jax.random.PRNGKey(0)
    pkey, xkey = jax.random.split(key)

    w1, b1, w2, b2 = init_params(pkey)
    params = prepare_params(w1, b1, w2, b2)   # hoisted one-time weight prep

    B = 8  # small demo batch (padded internally to one 128-row tile)
    feature = jax.random.normal(xkey, (B, IN_DIM), jnp.float32)
    lambda_term = 1.0  # unused in forward (gradient reversal is backward-only)

    out = discriminator_forward(
        feature, lambda_term, *params,
        min_grid_steps=_default_min_grid_steps())
    out = jax.block_until_ready(out)

    # Pure-JAX f32 reference (eval-mode dropout = identity).  Tolerance is
    # loose because the kernel uses bf16 matmul inputs and a bf16 output store
    # with f32 MXU accumulation.
    ref = jnp.maximum(feature @ w1 + b1, 0.0) @ w2 + b2
    assert out.shape == (B, OUT_DIM)
    assert jnp.allclose(out, ref, atol=5e-2, rtol=5e-2), (
        float(jnp.max(jnp.abs(out - ref))))

    print("KERNEL_OK")
</pallas_src>

<mosaic_0001>
module attributes {stable_mosaic.version = 11 : i64} {
  func.func @_discriminator_kernel(%arg0: i32, %arg1: memref<128x512xf32, #tpu.memory_space<vmem>>, %arg2: memref<512x512xbf16, #tpu.memory_space<vmem>>, %arg3: memref<1x512xf32, #tpu.memory_space<vmem>>, %arg4: memref<512x128xbf16, #tpu.memory_space<vmem>>, %arg5: memref<1x128xf32, #tpu.memory_space<vmem>>, %arg6: memref<128x128xbf16, #tpu.memory_space<vmem>>) attributes {dimension_semantics = [#tpu.dimension_semantics<parallel>], iteration_bounds = array<i64: 1>, scalar_prefetch = 0 : i64, scratch_operands = 0 : i64, tpu.core_type = #tpu.core_type<tc>, window_params = [{transform_indices = @transform_0, window_bounds = array<i64: 128, 512>}, {pipeline_mode = #tpu.pipeline_mode<synchronous>, transform_indices = @transform_1, window_bounds = array<i64: 512, 512>}, {pipeline_mode = #tpu.pipeline_mode<synchronous>, transform_indices = @transform_2, window_bounds = array<i64: 1, 512>}, {pipeline_mode = #tpu.pipeline_mode<synchronous>, transform_indices = @transform_3, window_bounds = array<i64: 512, 128>}, {pipeline_mode = #tpu.pipeline_mode<synchronous>, transform_indices = @transform_4, window_bounds = array<i64: 1, 128>}, {transform_indices = @transform_5, window_bounds = array<i64: 128, 128>}]} {
    %c0 = arith.constant 0 : index
    %c0_0 = arith.constant 0 : index
    %0 = vector.load %arg1[%c0, %c0_0] : memref<128x512xf32, #tpu.memory_space<vmem>>, vector<128x512xf32>
    %1 = arith.truncf %0 : vector<128x512xf32> to vector<128x512xbf16>
    %c0_1 = arith.constant 0 : index
    %c0_2 = arith.constant 0 : index
    %2 = vector.load %arg2[%c0_1, %c0_2] : memref<512x512xbf16, #tpu.memory_space<vmem>>, vector<512x512xbf16>
    %cst = arith.constant dense<0.000000e+00> : vector<128x512xf32>
    %3 = tpu.matmul %1, %2, %cst {dimension_numbers = #tpu.dot_dimension_numbers<[1], [0], [0], [1], [0, 0, 1, 1], [], []>} : vector<128x512xbf16>, vector<512x512xbf16>, vector<128x512xf32> -> vector<128x512xf32>
    %c0_3 = arith.constant 0 : index
    %c0_4 = arith.constant 0 : index
    %4 = vector.load %arg3[%c0_3, %c0_4] : memref<1x512xf32, #tpu.memory_space<vmem>>, vector<1x512xf32>
    %5 = vector.broadcast %4 : vector<1x512xf32> to vector<128x512xf32>
    %6 = arith.addf %3, %5 : vector<128x512xf32>
    %cst_5 = arith.constant 0.000000e+00 : f32
    %7 = vector.broadcast %cst_5 : f32 to vector<128x512xf32>
    %8 = arith.maximumf %6, %7 : vector<128x512xf32>
    %9 = arith.truncf %8 : vector<128x512xf32> to vector<128x512xbf16>
    %c0_6 = arith.constant 0 : index
    %c0_7 = arith.constant 0 : index
    %10 = vector.load %arg4[%c0_6, %c0_7] : memref<512x128xbf16, #tpu.memory_space<vmem>>, vector<512x128xbf16>
    %cst_8 = arith.constant dense<0.000000e+00> : vector<128x128xf32>
    %11 = tpu.matmul %9, %10, %cst_8 {dimension_numbers = #tpu.dot_dimension_numbers<[1], [0], [0], [1], [0, 0, 1, 1], [], []>} : vector<128x512xbf16>, vector<512x128xbf16>, vector<128x128xf32> -> vector<128x128xf32>
    %c0_9 = arith.constant 0 : index
    %c0_10 = arith.constant 0 : index
    %12 = vector.load %arg5[%c0_9, %c0_10] : memref<1x128xf32, #tpu.memory_space<vmem>>, vector<1x128xf32>
    %13 = vector.broadcast %12 : vector<1x128xf32> to vector<128x128xf32>
    %14 = arith.addf %11, %13 : vector<128x128xf32>
    %15 = arith.truncf %14 : vector<128x128xf32> to vector<128x128xbf16>
    %c0_11 = arith.constant 0 : index
    %c0_12 = arith.constant 0 : index
    %16 = vector.load %arg6[%c0_11, %c0_12] : memref<128x128xbf16, #tpu.memory_space<vmem>>, vector<128x128xbf16>
    tpu.vector_store %arg6[%c0_11, %c0_12], %15 {strides = array<i32>} : memref<128x128xbf16, #tpu.memory_space<vmem>>, vector<128x128xbf16>,
    return
  }
  func.func @transform_0(%arg0: i32) -> (i32, i32) {
    %c0_i32 = arith.constant 0 : i32
    %c0_i32_0 = arith.constant 0 : i32
    return %arg0, %c0_i32 : i32, i32
  }
  func.func @transform_1(%arg0: i32) -> (i32, i32) {
    %c0_i32 = arith.constant 0 : i32
    %c0_i32_0 = arith.constant 0 : i32
    %c0_i32_1 = arith.constant 0 : i32
    return %c0_i32, %c0_i32_0 : i32, i32
  }
  func.func @transform_2(%arg0: i32) -> (i32, i32) {
    %c0_i32 = arith.constant 0 : i32
    %c0_i32_0 = arith.constant 0 : i32
    %c0_i32_1 = arith.constant 0 : i32
    return %c0_i32, %c0_i32_0 : i32, i32
  }
  func.func @transform_3(%arg0: i32) -> (i32, i32) {
    %c0_i32 = arith.constant 0 : i32
    %c0_i32_0 = arith.constant 0 : i32
    %c0_i32_1 = arith.constant 0 : i32
    return %c0_i32, %c0_i32_0 : i32, i32
  }
  func.func @transform_4(%arg0: i32) -> (i32, i32) {
    %c0_i32 = arith.constant 0 : i32
    %c0_i32_0 = arith.constant 0 : i32
    %c0_i32_1 = arith.constant 0 : i32
    return %c0_i32, %c0_i32_0 : i32, i32
  }
  func.func @transform_5(%arg0: i32) -> (i32, i32) {
    %c0_i32 = arith.constant 0 : i32
    %c0_i32_0 = arith.constant 0 : i32
    return %arg0, %c0_i32 : i32, i32
  }
}

</mosaic_0001>

<llo_original>
// kernel: discriminator_forward.1
$region0: #{discriminator_forward.1}
  #allocation0 [shape = 'u32[]', space=smem, size = 0x4, offset = 0x4, fixed_abs, tag = 'smem constant byte address 0x4 - core index']
  #allocation1 [shape = 'u32[144,128]{1,0:T(1,128)}', space=vmem, size = 0x12000, scoped, tag = 'internal scratch']
  %s0 = inlined_call_operand.vmem [shape: f32[128,512], index: 0, kind: input, shape index: {}]
  %s1 = inlined_call_operand.hbm [shape: bf16[512,512], index: 1, kind: input, shape index: {}]
  %s2 = inlined_call_operand.vmem [shape: f32[1,512], index: 2, kind: input, shape index: {}]
  %s3 = inlined_call_operand.vmem [shape: bf16[512,128], index: 3, kind: input, shape index: {}]
  %s4 = inlined_call_operand.vmem [shape: f32[1,128], index: 4, kind: input, shape index: {}]
  %s5 = inlined_call_operand.vmem [shape: bf16[128,128], index: 5, kind: output, shape index: {}]
  %s6 = sld [smem:[#allocation0]]
  $region34: #{discriminator_forward.1} parent=0
    _
  %s8 = ssub.s32 1, %s6
  %s9 = scalar_select 0, %s8, %s6
  $region1: #{discriminator_forward.1} parent=0
    #allocation2 [shape = 'u8[524288]{0}', space=vmem, size = 0x80000, scoped, tag = 'input window, operand 1, single buffered']
    #allocation3 [shape = 's32[1]{0}', space=sflag, size = 0x4, scoped, tag = 'scoped memory for discriminator_forward.1']
    %10 = vsyncpa [#allocation3], 0
    // Predicated region
    $region2: #{discriminator_forward.1} parent=1 // pred_check
      _
    $region3: #{discriminator_forward.1} parent=1 // pred_check_branch
      %12 = sbr.rel (0) target = $region5
    $region4: #{discriminator_forward.1} parent=1 // pred_region
      _
    $region5: #{discriminator_forward.1} parent=1 // pred_fallthru
      _
    // Predicated region
    $region6: #{discriminator_forward.1} parent=1 // pred_check
      _
    $region7: #{discriminator_forward.1} parent=1 // pred_check_branch
      %14 = sbr.rel (0) target = $region9
    $region8: #{discriminator_forward.1} parent=1 // pred_region
      %s16 = ssub.s32 16384, 16384
      %17 = vsyncadd [#allocation3], %s16
      %s18 = sshll.u32 [#allocation2], 4
      %s19 = int_to_ptr.vmem [resolvable:$true] %s18
      %24 = dma.hbm_to_vmem [thread:$0]  %s1, 16384, %s19, [#allocation3], 256, 256, 16
    $region9: #{discriminator_forward.1} parent=1 // pred_fallthru
      _
    // Predicated region
    $region10: #{discriminator_forward.1} parent=1 // pred_check
      _
    $region11: #{discriminator_forward.1} parent=1 // pred_check_branch
      %26 = sbr.rel (0) target = $region13
    $region12: #{discriminator_forward.1} parent=1 // pred_region
      _
    $region13: #{discriminator_forward.1} parent=1 // pred_fallthru
      _
    // Predicated region
    $region14: #{discriminator_forward.1} parent=1 // pred_check
      _
    $region15: #{discriminator_forward.1} parent=1 // pred_check_branch
      %28 = sbr.rel (0) target = $region17
    $region16: #{discriminator_forward.1} parent=1 // pred_region
      _
    $region17: #{discriminator_forward.1} parent=1 // pred_fallthru
      _
    // Predicated region
    $region18: #{discriminator_forward.1} parent=1 // pred_check
      _
    $region19: #{discriminator_forward.1} parent=1 // pred_check_branch
      %30 = sbr.rel (0) target = $region21
    $region20: #{discriminator_forward.1} parent=1 // pred_region
      _
    $region21: #{discriminator_forward.1} parent=1 // pred_fallthru
      _
    // Predicated region
    $region22: #{discriminator_forward.1} parent=1 // pred_check
      _
    $region23: #{discriminator_forward.1} parent=1 // pred_check_branch
      %32 = sbr.rel (0) target = $region25
    $region24: #{discriminator_forward.1} parent=1 // pred_region
      %33 = dma.done [#allocation3], 16384
    $region25: #{discriminator_forward.1} parent=1 // pred_fallthru
      _
    %v35 = vld [vmem:[%s0] sm:$0xff]
    %v36 = vld [vmem:[%s0 + $0x8] sm:$0xff]
    %v37 = vld [vmem:[%s0 + $0x10] sm:$0xff]
    %v38 = vld [vmem:[%s0 + $0x18] sm:$0xff]
    %v39 = vld [vmem:[%s0 + $0x20] sm:$0xff]
    %v40 = vld [vmem:[%s0 + $0x28] sm:$0xff]
    %v41 = vld [vmem:[%s0 + $0x30] sm:$0xff]
    %v42 = vld [vmem:[%s0 + $0x38] sm:$0xff]
    %v43 = vld [vmem:[%s0 + $0x40] sm:$0xff]
    %v44 = vld [vmem:[%s0 + $0x48] sm:$0xff]
    %v45 = vld [vmem:[%s0 + $0x50] sm:$0xff]
    %v46 = vld [vmem:[%s0 + $0x58] sm:$0xff]
    %v47 = vld [vmem:[%s0 + $0x60] sm:$0xff]
    %v48 = vld [vmem:[%s0 + $0x68] sm:$0xff]
    %v49 = vld [vmem:[%s0 + $0x70] sm:$0xff]
    %v50 = vld [vmem:[%s0 + $0x78] sm:$0xff]
    %v51 = vld [vmem:[%s0 + $0x80] sm:$0xff]
    %v52 = vld [vmem:[%s0 + $0x88] sm:$0xff]
    %v53 = vld [vmem:[%s0 + $0x90] sm:$0xff]
    %v54 = vld [vmem:[%s0 + $0x98] sm:$0xff]
    %v55 = vld [vmem:[%s0 + $0xa0] sm:$0xff]
    %v56 = vld [vmem:[%s0 + $0xa8] sm:$0xff]
    %v57 = vld [vmem:[%s0 + $0xb0] sm:$0xff]
    %v58 = vld [vmem:[%s0 + $0xb8] sm:$0xff]
    %v59 = vld [vmem:[%s0 + $0xc0] sm:$0xff]
    %v60 = vld [vmem:[%s0 + $0xc8] sm:$0xff]
    %v61 = vld [vmem:[%s0 + $0xd0] sm:$0xff]
    %v62 = vld [vmem:[%s0 + $0xd8] sm:$0xff]
    %v63 = vld [vmem:[%s0 + $0xe0] sm:$0xff]
    %v64 = vld [vmem:[%s0 + $0xe8] sm:$0xff]
    %v65 = vld [vmem:[%s0 + $0xf0] sm:$0xff]
    %v66 = vld [vmem:[%s0 + $0xf8] sm:$0xff]
    %v67 = vld [vmem:[%s0 + $0x100] sm:$0xff]
    %v68 = vld [vmem:[%s0 + $0x108] sm:$0xff]
    %v69 = vld [vmem:[%s0 + $0x110] sm:$0xff]
    %v70 = vld [vmem:[%s0 + $0x118] sm:$0xff]
    %v71 = vld [vmem:[%s0 + $0x120] sm:$0xff]
    %v72 = vld [vmem:[%s0 + $0x128] sm:$0xff]
    %v73 = vld [vmem:[%s0 + $0x130] sm:$0xff]
    %v74 = vld [vmem:[%s0 + $0x138] sm:$0xff]
    %v75 = vld [vmem:[%s0 + $0x140] sm:$0xff]
    %v76 = vld [vmem:[%s0 + $0x148] sm:$0xff]
    %v77 = vld [vmem:[%s0 + $0x150] sm:$0xff]
    %v78 = vld [vmem:[%s0 + $0x158] sm:$0xff]
    %v79 = vld [vmem:[%s0 + $0x160] sm:$0xff]
    %v80 = vld [vmem:[%s0 + $0x168] sm:$0xff]
    %v81 = vld [vmem:[%s0 + $0x170] sm:$0xff]
    %v82 = vld [vmem:[%s0 + $0x178] sm:$0xff]
    %v83 = vld [vmem:[%s0 + $0x180] sm:$0xff]
    %v84 = vld [vmem:[%s0 + $0x188] sm:$0xff]
    %v85 = vld [vmem:[%s0 + $0x190] sm:$0xff]
    %v86 = vld [vmem:[%s0 + $0x198] sm:$0xff]
    %v87 = vld [vmem:[%s0 + $0x1a0] sm:$0xff]
    %v88 = vld [vmem:[%s0 + $0x1a8] sm:$0xff]
    %v89 = vld [vmem:[%s0 + $0x1b0] sm:$0xff]
    %v90 = vld [vmem:[%s0 + $0x1b8] sm:$0xff]
    %v91 = vld [vmem:[%s0 + $0x1c0] sm:$0xff]
    %v92 = vld [vmem:[%s0 + $0x1c8] sm:$0xff]
    %v93 = vld [vmem:[%s0 + $0x1d0] sm:$0xff]
    %v94 = vld [vmem:[%s0 + $0x1d8] sm:$0xff]
    %v95 = vld [vmem:[%s0 + $0x1e0] sm:$0xff]
    %v96 = vld [vmem:[%s0 + $0x1e8] sm:$0xff]
    %v97 = vld [vmem:[%s0 + $0x1f0] sm:$0xff]
    %v98 = vld [vmem:[%s0 + $0x1f8] sm:$0xff]
    %v99 = vpack.c.bf16 %v39, %v35
    %v100 = vpack.c.bf16 %v40, %v36
    %v101 = vpack.c.bf16 %v41, %v37
    %v102 = vpack.c.bf16 %v42, %v38
    %v103 = vpack.c.bf16 %v47, %v43
    %v104 = vpack.c.bf16 %v48, %v44
    %v105 = vpack.c.bf16 %v49, %v45
    %v106 = vpack.c.bf16 %v50, %v46
    %v107 = vpack.c.bf16 %v55, %v51
    %v108 = vpack.c.bf16 %v56, %v52
    %v109 = vpack.c.bf16 %v57, %v53
    %v110 = vpack.c.bf16 %v58, %v54
    %v111 = vpack.c.bf16 %v63, %v59
    %v112 = vpack.c.bf16 %v64, %v60
    %v113 = vpack.c.bf16 %v65, %v61
    %v114 = vpack.c.bf16 %v66, %v62
    %v115 = vpack.c.bf16 %v71, %v67
    %v116 = vpack.c.bf16 %v72, %v68
    %v117 = vpack.c.bf16 %v73, %v69
    %v118 = vpack.c.bf16 %v74, %v70
    %v119 = vpack.c.bf16 %v79, %v75
    %v120 = vpack.c.bf16 %v80, %v76
    %v121 = vpack.c.bf16 %v81, %v77
    %v122 = vpack.c.bf16 %v82, %v78
    %v123 = vpack.c.bf16 %v87, %v83
    %v124 = vpack.c.bf16 %v88, %v84
    %v125 = vpack.c.bf16 %v89, %v85
    %v126 = vpack.c.bf16 %v90, %v86
    %v127 = vpack.c.bf16 %v95, %v91
    %v128 = vpack.c.bf16 %v96, %v92
    %v129 = vpack.c.bf16 %v97, %v93
    %v130 = vpack.c.bf16 %v98, %v94
    %v131 = vld [vmem:[#allocation2] sm:$0xff]
    %v132 = vld [vmem:[#allocation2 + $0x8] sm:$0xff]
    %v133 = vld [vmem:[#allocation2 + $0x10] sm:$0xff]
    %v134 = vld [vmem:[#allocation2 + $0x18] sm:$0xff]
    %v135 = vld [vmem:[#allocation2 + $0x20] sm:$0xff]
    %v136 = vld [vmem:[#allocation2 + $0x28] sm:$0xff]
    %v137 = vld [vmem:[#allocation2 + $0x30] sm:$0xff]
    %v138 = vld [vmem:[#allocation2 + $0x38] sm:$0xff]
    %v139 = vld [vmem:[#allocation2 + $0x40] sm:$0xff]
    %v140 = vld [vmem:[#allocation2 + $0x48] sm:$0xff]
    %v141 = vld [vmem:[#allocation2 + $0x50] sm:$0xff]
    %v142 = vld [vmem:[#allocation2 + $0x58] sm:$0xff]
    %v143 = vld [vmem:[#allocation2 + $0x60] sm:$0xff]
    %v144 = vld [vmem:[#allocation2 + $0x68] sm:$0xff]
    %v145 = vld [vmem:[#allocation2 + $0x70] sm:$0xff]
    %v146 = vld [vmem:[#allocation2 + $0x78] sm:$0xff]
    %v147 = vld [vmem:[#allocation2 + $0x80] sm:$0xff]
    %v148 = vld [vmem:[#allocation2 + $0x88] sm:$0xff]
    %v149 = vld [vmem:[#allocation2 + $0x90] sm:$0xff]
    %v150 = vld [vmem:[#allocation2 + $0x98] sm:$0xff]
    %v151 = vld [vmem:[#allocation2 + $0xa0] sm:$0xff]
    %v152 = vld [vmem:[#allocation2 + $0xa8] sm:$0xff]
    %v153 = vld [vmem:[#allocation2 + $0xb0] sm:$0xff]
    %v154 = vld [vmem:[#allocation2 + $0xb8] sm:$0xff]
    %v155 = vld [vmem:[#allocation2 + $0xc0] sm:$0xff]
    %v156 = vld [vmem:[#allocation2 + $0xc8] sm:$0xff]
    %v157 = vld [vmem:[#allocation2 + $0xd0] sm:$0xff]
    %v158 = vld [vmem:[#allocation2 + $0xd8] sm:$0xff]
    %v159 = vld [vmem:[#allocation2 + $0xe0] sm:$0xff]
    %v160 = vld [vmem:[#allocation2 + $0xe8] sm:$0xff]
    %v161 = vld [vmem:[#allocation2 + $0xf0] sm:$0xff]
    %v162 = vld [vmem:[#allocation2 + $0xf8] sm:$0xff]
    %v163 = vld [vmem:[#allocation2 + $0x100] sm:$0xff]
    %v164 = vld [vmem:[#allocation2 + $0x108] sm:$0xff]
    %v165 = vld [vmem:[#allocation2 + $0x110] sm:$0xff]
    %v166 = vld [vmem:[#allocation2 + $0x118] sm:$0xff]
    %v167 = vld [vmem:[#allocation2 + $0x120] sm:$0xff]
    %v168 = vld [vmem:[#allocation2 + $0x128] sm:$0xff]
    %v169 = vld [vmem:[#allocation2 + $0x130] sm:$0xff]
    %v170 = vld [vmem:[#allocation2 + $0x138] sm:$0xff]
    %v171 = vld [vmem:[#allocation2 + $0x140] sm:$0xff]
    %v172 = vld [vmem:[#allocation2 + $0x148] sm:$0xff]
    %v173 = vld [vmem:[#allocation2 + $0x150] sm:$0xff]
    %v174 = vld [vmem:[#allocation2 + $0x158] sm:$0xff]
    %v175 = vld [vmem:[#allocation2 + $0x160] sm:$0xff]
    %v176 = vld [vmem:[#allocation2 + $0x168] sm:$0xff]
    %v177 = vld [vmem:[#allocation2 + $0x170] sm:$0xff]
    %v178 = vld [vmem:[#allocation2 + $0x178] sm:$0xff]
    %v179 = vld [vmem:[#allocation2 + $0x180] sm:$0xff]
    %v180 = vld [vmem:[#allocation2 + $0x188] sm:$0xff]
    %v181 = vld [vmem:[#allocation2 + $0x190] sm:$0xff]
    %v182 = vld [vmem:[#allocation2 + $0x198] sm:$0xff]
    %v183 = vld [vmem:[#allocation2 + $0x1a0] sm:$0xff]
    %v184 = vld [vmem:[#allocation2 + $0x1a8] sm:$0xff]
    %v185 = vld [vmem:[#allocation2 + $0x1b0] sm:$0xff]
    %v186 = vld [vmem:[#allocation2 + $0x1b8] sm:$0xff]
    %v187 = vld [vmem:[#allocation2 + $0x1c0] sm:$0xff]
    %v188 = vld [vmem:[#allocation2 + $0x1c8] sm:$0xff]
    %v189 = vld [vmem:[#allocation2 + $0x1d0] sm:$0xff]
    %v190 = vld [vmem:[#allocation2 + $0x1d8] sm:$0xff]
    %v191 = vld [vmem:[#allocation2 + $0x1e0] sm:$0xff]
    %v192 = vld [vmem:[#allocation2 + $0x1e8] sm:$0xff]
    %v193 = vld [vmem:[#allocation2 + $0x1f0] sm:$0xff]
    %v194 = vld [vmem:[#allocation2 + $0x1f8] sm:$0xff]
    %v195 = vld [vmem:[#allocation2 + $0x200] sm:$0xff]
    %v196 = vld [vmem:[#allocation2 + $0x208] sm:$0xff]
    %v197 = vld [vmem:[#allocation2 + $0x210] sm:$0xff]
    %v198 = vld [vmem:[#allocation2 + $0x218] sm:$0xff]
    %v199 = vld [vmem:[#allocation2 + $0x220] sm:$0xff]
    %v200 = vld [vmem:[#allocation2 + $0x228] sm:$0xff]
    %v201 = vld [vmem:[#allocation2 + $0x230] sm:$0xff]
    %v202 = vld [vmem:[#allocation2 + $0x238] sm:$0xff]
    %v203 = vld [vmem:[#allocation2 + $0x240] sm:$0xff]
    %v204 = vld [vmem:[#allocation2 + $0x248] sm:$0xff]
    %v205 = vld [vmem:[#allocation2 + $0x250] sm:$0xff]
    %v206 = vld [vmem:[#allocation2 + $0x258] sm:$0xff]
    %v207 = vld [vmem:[#allocation2 + $0x260] sm:$0xff]
    %v208 = vld [vmem:[#allocation2 + $0x268] sm:$0xff]
    %v209 = vld [vmem:[#allocation2 + $0x270] sm:$0xff]
    %v210 = vld [vmem:[#allocation2 + $0x278] sm:$0xff]
    %v211 = vld [vmem:[#allocation2 + $0x280] sm:$0xff]
    %v212 = vld [vmem:[#allocation2 + $0x288] sm:$0xff]
    %v213 = vld [vmem:[#allocation2 + $0x290] sm:$0xff]
    %v214 = vld [vmem:[#allocation2 + $0x298] sm:$0xff]
    %v215 = vld [vmem:[#allocation2 + $0x2a0] sm:$0xff]
    %v216 = vld [vmem:[#allocation2 + $0x2a8] sm:$0xff]
    %v217 = vld [vmem:[#allocation2 + $0x2b0] sm:$0xff]
    %v218 = vld [vmem:[#allocation2 + $0x2b8] sm:$0xff]
    %v219 = vld [vmem:[#allocation2 + $0x2c0] sm:$0xff]
    %v220 = vld [vmem:[#allocation2 + $0x2c8] sm:$0xff]
    %v221 = vld [vmem:[#allocation2 + $0x2d0] sm:$0xff]
    %v222 = vld [vmem:[#allocation2 + $0x2d8] sm:$0xff]
    %v223 = vld [vmem:[#allocation2 + $0x2e0] sm:$0xff]
    %v224 = vld [vmem:[#allocation2 + $0x2e8] sm:$0xff]
    %v225 = vld [vmem:[#allocation2 + $0x2f0] sm:$0xff]
    %v226 = vld [vmem:[#allocation2 + $0x2f8] sm:$0xff]
    %v227 = vld [vmem:[#allocation2 + $0x300] sm:$0xff]
    %v228 = vld [vmem:[#allocation2 + $0x308] sm:$0xff]
    %v229 = vld [vmem:[#allocation2 + $0x310] sm:$0xff]
    %v230 = vld [vmem:[#allocation2 + $0x318] sm:$0xff]
    %v231 = vld [vmem:[#allocation2 + $0x320] sm:$0xff]
    %v232 = vld [vmem:[#allocation2 + $0x328] sm:$0xff]
    %v233 = vld [vmem:[#allocation2 + $0x330] sm:$0xff]
    %v234 = vld [vmem:[#allocation2 + $0x338] sm:$0xff]
    %v235 = vld [vmem:[#allocation2 + $0x340] sm:$0xff]
    %v236 = vld [vmem:[#allocation2 + $0x348] sm:$0xff]
    %v237 = vld [vmem:[#allocation2 + $0x350] sm:$0xff]
    %v238 = vld [vmem:[#allocation2 + $0x358] sm:$0xff]
    %v239 = vld [vmem:[#allocation2 + $0x360] sm:$0xff]
    %v240 = vld [vmem:[#allocation2 + $0x368] sm:$0xff]
    %v241 = vld [vmem:[#allocation2 + $0x370] sm:$0xff]
    %v242 = vld [vmem:[#allocation2 + $0x378] sm:$0xff]
    %v243 = vld [vmem:[#allocation2 + $0x380] sm:$0xff]
    %v244 = vld [vmem:[#allocation2 + $0x388] sm:$0xff]
    %v245 = vld [vmem:[#allocation2 + $0x390] sm:$0xff]
    %v246 = vld [vmem:[#allocation2 + $0x398] sm:$0xff]
    %v247 = vld [vmem:[#allocation2 + $0x3a0] sm:$0xff]
    %v248 = vld [vmem:[#allocation2 + $0x3a8] sm:$0xff]
    %v249 = vld [vmem:[#allocation2 + $0x3b0] sm:$0xff]
    %v250 = vld [vmem:[#allocation2 + $0x3b8] sm:$0xff]
    %v251 = vld [vmem:[#allocation2 + $0x3c0] sm:$0xff]
    %v252 = vld [vmem:[#allocation2 + $0x3c8] sm:$0xff]
    %v253 = vld [vmem:[#allocation2 + $0x3d0] sm:$0xff]
    %v254 = vld [vmem:[#allocation2 + $0x3d8] sm:$0xff]
    %v255 = vld [vmem:[#allocation2 + $0x3e0] sm:$0xff]
    %v256 = vld [vmem:[#allocation2 + $0x3e8] sm:$0xff]
    %v257 = vld [vmem:[#allocation2 + $0x3f0] sm:$0xff]
    %v258 = vld [vmem:[#allocation2 + $0x3f8] sm:$0xff]
    %v259 = vld [vmem:[%s2] sm:$0xf]
    %v261 = vlaneseq
    %v262 = vshrl.u32 %v261, 7
    %v263 = vsub.s32 0, %v262
    %v264 = vrot.slane %v259, %v263
    %v265 = vlaneseq
    %v266 = vshrl.u32 %v265, 7
    %v267 = vsub.s32 1, %v266
    %v268 = vrot.slane %v259, %v267
    %v269 = vlaneseq
    %v270 = vshrl.u32 %v269, 7
    %v271 = vsub.s32 2, %v270
    %v272 = vrot.slane %v259, %v271
    %v273 = vlaneseq
    %v274 = vshrl.u32 %v273, 7
    %v275 = vsub.s32 3, %v274
    %v276 = vrot.slane %v259, %v275
    %v409 = vunpack.c.l.b16 %v131
    %v410 = vunpack.c.h.b16 %v131
    %v411 = vunpack.c.l.b16 %v132
    %v412 = vunpack.c.h.b16 %v132
    %v413 = vunpack.c.l.b16 %v133
    %v414 = vunpack.c.h.b16 %v133
    %v415 = vunpack.c.l.b16 %v134
    %v416 = vunpack.c.h.b16 %v134
    %v417 = vunpack.c.l.b16 %v135
    %v418 = vunpack.c.h.b16 %v135
    %v419 = vunpack.c.l.b16 %v136
    %v420 = vunpack.c.h.b16 %v136
    %v421 = vunpack.c.l.b16 %v137
    %v422 = vunpack.c.h.b16 %v137
    %v423 = vunpack.c.l.b16 %v138
    %v424 = vunpack.c.h.b16 %v138
    %v425 = vunpack.c.l.b16 %v139
    %v426 = vunpack.c.h.b16 %v139
    %v427 = vunpack.c.l.b16 %v140
    %v428 = vunpack.c.h.b16 %v140
    %v429 = vunpack.c.l.b16 %v141
    %v430 = vunpack.c.h.b16 %v141
    %v431 = vunpack.c.l.b16 %v142
    %v432 = vunpack.c.h.b16 %v142
    %v433 = vunpack.c.l.b16 %v143
    %v434 = vunpack.c.h.b16 %v143
    %v435 = vunpack.c.l.b16 %v144
    %v436 = vunpack.c.h.b16 %v144
    %v437 = vunpack.c.l.b16 %v145
    %v438 = vunpack.c.h.b16 %v145
    %v439 = vunpack.c.l.b16 %v146
    %v440 = vunpack.c.h.b16 %v146
    %v441 = vunpack.c.l.b16 %v147
    %v442 = vunpack.c.h.b16 %v147
    %v443 = vunpack.c.l.b16 %v148
    %v444 = vunpack.c.h.b16 %v148
    %v445 = vunpack.c.l.b16 %v149
    %v446 = vunpack.c.h.b16 %v149
    %v447 = vunpack.c.l.b16 %v150
    %v448 = vunpack.c.h.b16 %v150
    %v449 = vunpack.c.l.b16 %v151
    %v450 = vunpack.c.h.b16 %v151
    %v451 = vunpack.c.l.b16 %v152
    %v452 = vunpack.c.h.b16 %v152
    %v453 = vunpack.c.l.b16 %v153
    %v454 = vunpack.c.h.b16 %v153
    %v455 = vunpack.c.l.b16 %v154
    %v456 = vunpack.c.h.b16 %v154
    %v457 = vunpack.c.l.b16 %v155
    %v458 = vunpack.c.h.b16 %v155
    %v459 = vunpack.c.l.b16 %v156
    %v460 = vunpack.c.h.b16 %v156
    %v461 = vunpack.c.l.b16 %v157
    %v462 = vunpack.c.h.b16 %v157
    %v463 = vunpack.c.l.b16 %v158
    %v464 = vunpack.c.h.b16 %v158
    %v465 = vunpack.c.l.b16 %v159
    %v466 = vunpack.c.h.b16 %v159
    %v467 = vunpack.c.l.b16 %v160
    %v468 = vunpack.c.h.b16 %v160
    %v469 = vunpack.c.l.b16 %v161
    %v470 = vunpack.c.h.b16 %v161
    %v471 = vunpack.c.l.b16 %v162
    %v472 = vunpack.c.h.b16 %v162
    %v473 = vunpack.c.l.b16 %v163
    %v474 = vunpack.c.h.b16 %v163
    %v475 = vunpack.c.l.b16 %v164
    %v476 = vunpack.c.h.b16 %v164
    %v477 = vunpack.c.l.b16 %v165
    %v478 = vunpack.c.h.b16 %v165
    %v479 = vunpack.c.l.b16 %v166
    %v480 = vunpack.c.h.b16 %v166
    %v481 = vunpack.c.l.b16 %v167
    %v482 = vunpack.c.h.b16 %v167
    %v483 = vunpack.c.l.b16 %v168
    %v484 = vunpack.c.h.b16 %v168
    %v485 = vunpack.c.l.b16 %v169
    %v486 = vunpack.c.h.b16 %v169
    %v487 = vunpack.c.l.b16 %v170
    %v488 = vunpack.c.h.b16 %v170
    %v489 = vunpack.c.l.b16 %v171
    %v490 = vunpack.c.h.b16 %v171
    %v491 = vunpack.c.l.b16 %v172
    %v492 = vunpack.c.h.b16 %v172
    %v493 = vunpack.c.l.b16 %v173
    %v494 = vunpack.c.h.b16 %v173
    %v495 = vunpack.c.l.b16 %v174
    %v496 = vunpack.c.h.b16 %v174
    %v497 = vunpack.c.l.b16 %v175
    %v498 = vunpack.c.h.b16 %v175
    %v499 = vunpack.c.l.b16 %v176
    %v500 = vunpack.c.h.b16 %v176
    %v501 = vunpack.c.l.b16 %v177
    %v502 = vunpack.c.h.b16 %v177
    %v503 = vunpack.c.l.b16 %v178
    %v504 = vunpack.c.h.b16 %v178
    %v505 = vunpack.c.l.b16 %v179
    %v506 = vunpack.c.h.b16 %v179
    %v507 = vunpack.c.l.b16 %v180
    %v508 = vunpack.c.h.b16 %v180
    %v509 = vunpack.c.l.b16 %v181
    %v510 = vunpack.c.h.b16 %v181
    %v511 = vunpack.c.l.b16 %v182
    %v512 = vunpack.c.h.b16 %v182
    %v513 = vunpack.c.l.b16 %v183
    %v514 = vunpack.c.h.b16 %v183
    %v515 = vunpack.c.l.b16 %v184
    %v516 = vunpack.c.h.b16 %v184
    %v517 = vunpack.c.l.b16 %v185
    %v518 = vunpack.c.h.b16 %v185
    %v519 = vunpack.c.l.b16 %v186
    %v520 = vunpack.c.h.b16 %v186
    %v521 = vunpack.c.l.b16 %v187
    %v522 = vunpack.c.h.b16 %v187
    %v523 = vunpack.c.l.b16 %v188
    %v524 = vunpack.c.h.b16 %v188
    %v525 = vunpack.c.l.b16 %v189
    %v526 = vunpack.c.h.b16 %v189
    %v527 = vunpack.c.l.b16 %v190
    %v528 = vunpack.c.h.b16 %v190
    %v529 = vunpack.c.l.b16 %v191
    %v530 = vunpack.c.h.b16 %v191
    %v531 = vunpack.c.l.b16 %v192
    %v532 = vunpack.c.h.b16 %v192
    %v533 = vunpack.c.l.b16 %v193
    %v534 = vunpack.c.h.b16 %v193
    %v535 = vunpack.c.l.b16 %v194
    %v536 = vunpack.c.h.b16 %v194
    %v537 = vunpack.c.l.b16 %v195
    %v538 = vunpack.c.h.b16 %v195
    %v539 = vunpack.c.l.b16 %v196
    %v540 = vunpack.c.h.b16 %v196
    %v541 = vunpack.c.l.b16 %v197
    %v542 = vunpack.c.h.b16 %v197
    %v543 = vunpack.c.l.b16 %v198
    %v544 = vunpack.c.h.b16 %v198
    %v545 = vunpack.c.l.b16 %v199
    %v546 = vunpack.c.h.b16 %v199
    %v547 = vunpack.c.l.b16 %v200
    %v548 = vunpack.c.h.b16 %v200
    %v549 = vunpack.c.l.b16 %v201
    %v550 = vunpack.c.h.b16 %v201
    %v551 = vunpack.c.l.b16 %v202
    %v552 = vunpack.c.h.b16 %v202
    %v553 = vunpack.c.l.b16 %v203
    %v554 = vunpack.c.h.b16 %v203
    %v555 = vunpack.c.l.b16 %v204
    %v556 = vunpack.c.h.b16 %v204
    %v557 = vunpack.c.l.b16 %v205
    %v558 = vunpack.c.h.b16 %v205
    %v559 = vunpack.c.l.b16 %v206
    %v560 = vunpack.c.h.b16 %v206
    %v561 = vunpack.c.l.b16 %v207
    %v562 = vunpack.c.h.b16 %v207
    %v563 = vunpack.c.l.b16 %v208
    %v564 = vunpack.c.h.b16 %v208
    %v565 = vunpack.c.l.b16 %v209
    %v566 = vunpack.c.h.b16 %v209
    %v567 = vunpack.c.l.b16 %v210
    %v568 = vunpack.c.h.b16 %v210
    %v569 = vunpack.c.l.b16 %v211
    %v570 = vunpack.c.h.b16 %v211
    %v571 = vunpack.c.l.b16 %v212
    %v572 = vunpack.c.h.b16 %v212
    %v573 = vunpack.c.l.b16 %v213
    %v574 = vunpack.c.h.b16 %v213
    %v575 = vunpack.c.l.b16 %v214
    %v576 = vunpack.c.h.b16 %v214
    %v577 = vunpack.c.l.b16 %v215
    %v578 = vunpack.c.h.b16 %v215
    %v579 = vunpack.c.l.b16 %v216
    %v580 = vunpack.c.h.b16 %v216
    %v581 = vunpack.c.l.b16 %v217
    %v582 = vunpack.c.h.b16 %v217
    %v583 = vunpack.c.l.b16 %v218
    %v584 = vunpack.c.h.b16 %v218
    %v585 = vunpack.c.l.b16 %v219
    %v586 = vunpack.c.h.b16 %v219
    %v587 = vunpack.c.l.b16 %v220
    %v588 = vunpack.c.h.b16 %v220
    %v589 = vunpack.c.l.b16 %v221
    %v590 = vunpack.c.h.b16 %v221
    %v591 = vunpack.c.l.b16 %v222
    %v592 = vunpack.c.h.b16 %v222
    %v593 = vunpack.c.l.b16 %v223
    %v594 = vunpack.c.h.b16 %v223
    %v595 = vunpack.c.l.b16 %v224
    %v596 = vunpack.c.h.b16 %v224
    %v597 = vunpack.c.l.b16 %v225
    %v598 = vunpack.c.h.b16 %v225
    %v599 = vunpack.c.l.b16 %v226
    %v600 = vunpack.c.h.b16 %v226
    %v601 = vunpack.c.l.b16 %v227
    %v602 = vunpack.c.h.b16 %v227
    %v603 = vunpack.c.l.b16 %v228
    %v604 = vunpack.c.h.b16 %v228
    %v605 = vunpack.c.l.b16 %v229
    %v606 = vunpack.c.h.b16 %v229
    %v607 = vunpack.c.l.b16 %v230
    %v608 = vunpack.c.h.b16 %v230
    %v609 = vunpack.c.l.b16 %v231
    %v610 = vunpack.c.h.b16 %v231
    %v611 = vunpack.c.l.b16 %v232
    %v612 = vunpack.c.h.b16 %v232
    %v613 = vunpack.c.l.b16 %v233
    %v614 = vunpack.c.h.b16 %v233
    %v615 = vunpack.c.l.b16 %v234
    %v616 = vunpack.c.h.b16 %v234
    %v617 = vunpack.c.l.b16 %v235
    %v618 = vunpack.c.h.b16 %v235
    %v619 = vunpack.c.l.b16 %v236
    %v620 = vunpack.c.h.b16 %v236
    %v621 = vunpack.c.l.b16 %v237
    %v622 = vunpack.c.h.b16 %v237
    %v623 = vunpack.c.l.b16 %v238
    %v624 = vunpack.c.h.b16 %v238
    %v625 = vunpack.c.l.b16 %v239
    %v626 = vunpack.c.h.b16 %v239
    %v627 = vunpack.c.l.b16 %v240
    %v628 = vunpack.c.h.b16 %v240
    %v629 = vunpack.c.l.b16 %v241
    %v630 = vunpack.c.h.b16 %v241
    %v631 = vunpack.c.l.b16 %v242
    %v632 = vunpack.c.h.b16 %v242
    %v633 = vunpack.c.l.b16 %v243
    %v634 = vunpack.c.h.b16 %v243
    %v635 = vunpack.c.l.b16 %v244
    %v636 = vunpack.c.h.b16 %v244
    %v637 = vunpack.c.l.b16 %v245
    %v638 = vunpack.c.h.b16 %v245
    %v639 = vunpack.c.l.b16 %v246
    %v640 = vunpack.c.h.b16 %v246
    %v641 = vunpack.c.l.b16 %v247
    %v642 = vunpack.c.h.b16 %v247
    %v643 = vunpack.c.l.b16 %v248
    %v644 = vunpack.c.h.b16 %v248
    %v645 = vunpack.c.l.b16 %v249
    %v646 = vunpack.c.h.b16 %v249
    %v647 = vunpack.c.l.b16 %v250
    %v648 = vunpack.c.h.b16 %v250
    %v649 = vunpack.c.l.b16 %v251
    %v650 = vunpack.c.h.b16 %v251
    %v651 = vunpack.c.l.b16 %v252
    %v652 = vunpack.c.h.b16 %v252
    %v653 = vunpack.c.l.b16 %v253
    %v654 = vunpack.c.h.b16 %v253
    %v655 = vunpack.c.l.b16 %v254
    %v656 = vunpack.c.h.b16 %v254
    %v657 = vunpack.c.l.b16 %v255
    %v658 = vunpack.c.h.b16 %v255
    %v659 = vunpack.c.l.b16 %v256
    %v660 = vunpack.c.h.b16 %v256
    %v661 = vunpack.c.l.b16 %v257
    %v662 = vunpack.c.h.b16 %v257
    %v663 = vunpack.c.l.b16 %v258
    %v664 = vunpack.c.h.b16 %v258
    %v665 = vpack.c.b16 %v413, %v409
    %v666 = vpack.c.b16 %v414, %v410
    %v667 = vpack.c.b16 %v415, %v411
    %v668 = vpack.c.b16 %v416, %v412
    %v669 = vpack.c.b16 %v421, %v417
    %v670 = vpack.c.b16 %v422, %v418
    %v671 = vpack.c.b16 %v423, %v419
    %v672 = vpack.c.b16 %v424, %v420
    %v673 = vpack.c.b16 %v429, %v425
    %v674 = vpack.c.b16 %v430, %v426
    %v675 = vpack.c.b16 %v431, %v427
    %v676 = vpack.c.b16 %v432, %v428
    %v677 = vpack.c.b16 %v437, %v433
    %v678 = vpack.c.b16 %v438, %v434
    %v679 = vpack.c.b16 %v439, %v435
    %v680 = vpack.c.b16 %v440, %v436
    %v681 = vpack.c.b16 %v445, %v441
    %v682 = vpack.c.b16 %v446, %v442
    %v683 = vpack.c.b16 %v447, %v443
    %v684 = vpack.c.b16 %v448, %v444
    %v685 = vpack.c.b16 %v453, %v449
    %v686 = vpack.c.b16 %v454, %v450
    %v687 = vpack.c.b16 %v455, %v451
    %v688 = vpack.c.b16 %v456, %v452
    %v689 = vpack.c.b16 %v461, %v457
    %v690 = vpack.c.b16 %v462, %v458
    %v691 = vpack.c.b16 %v463, %v459
    %v692 = vpack.c.b16 %v464, %v460
    %v693 = vpack.c.b16 %v469, %v465
    %v694 = vpack.c.b16 %v470, %v466
    %v695 = vpack.c.b16 %v471, %v467
    %v696 = vpack.c.b16 %v472, %v468
    %v697 = vpack.c.b16 %v477, %v473
    %v698 = vpack.c.b16 %v478, %v474
    %v699 = vpack.c.b16 %v479, %v475
    %v700 = vpack.c.b16 %v480, %v476
    %v701 = vpack.c.b16 %v485, %v481
    %v702 = vpack.c.b16 %v486, %v482
    %v703 = vpack.c.b16 %v487, %v483
    %v704 = vpack.c.b16 %v488, %v484
    %v705 = vpack.c.b16 %v493, %v489
    %v706 = vpack.c.b16 %v494, %v490
    %v707 = vpack.c.b16 %v495, %v491
    %v708 = vpack.c.b16 %v496, %v492
    %v709 = vpack.c.b16 %v501, %v497
    %v710 = vpack.c.b16 %v502, %v498
    %v711 = vpack.c.b16 %v503, %v499
    %v712 = vpack.c.b16 %v504, %v500
    %v713 = vpack.c.b16 %v509, %v505
    %v714 = vpack.c.b16 %v510, %v506
    %v715 = vpack.c.b16 %v511, %v507
    %v716 = vpack.c.b16 %v512, %v508
    %v717 = vpack.c.b16 %v517, %v513
    %v718 = vpack.c.b16 %v518, %v514
    %v719 = vpack.c.b16 %v519, %v515
    %v720 = vpack.c.b16 %v520, %v516
    %v721 = vpack.c.b16 %v525, %v521
    %v722 = vpack.c.b16 %v526, %v522
    %v723 = vpack.c.b16 %v527, %v523
    %v724 = vpack.c.b16 %v528, %v524
    %v725 = vpack.c.b16 %v533, %v529
    %v726 = vpack.c.b16 %v534, %v530
    %v727 = vpack.c.b16 %v535, %v531
    %v728 = vpack.c.b16 %v536, %v532
    %v729 = vpack.c.b16 %v541, %v537
    %v730 = vpack.c.b16 %v542, %v538
    %v731 = vpack.c.b16 %v543, %v539
    %v732 = vpack.c.b16 %v544, %v540
    %v733 = vpack.c.b16 %v549, %v545
    %v734 = vpack.c.b16 %v550, %v546
    %v735 = vpack.c.b16 %v551, %v547
    %v736 = vpack.c.b16 %v552, %v548
    %v737 = vpack.c.b16 %v557, %v553
    %v738 = vpack.c.b16 %v558, %v554
    %v739 = vpack.c.b16 %v559, %v555
    %v740 = vpack.c.b16 %v560, %v556
    %v741 = vpack.c.b16 %v565, %v561
    %v742 = vpack.c.b16 %v566, %v562
    %v743 = vpack.c.b16 %v567, %v563
    %v744 = vpack.c.b16 %v568, %v564
    %v745 = vpack.c.b16 %v573, %v569
    %v746 = vpack.c.b16 %v574, %v570
    %v747 = vpack.c.b16 %v575, %v571
    %v748 = vpack.c.b16 %v576, %v572
    %v749 = vpack.c.b16 %v581, %v577
    %v750 = vpack.c.b16 %v582, %v578
    %v751 = vpack.c.b16 %v583, %v579
    %v752 = vpack.c.b16 %v584, %v580
    %v753 = vpack.c.b16 %v589, %v585
    %v754 = vpack.c.b16 %v590, %v586
    %v755 = vpack.c.b16 %v591, %v587
    %v756 = vpack.c.b16 %v592, %v588
    %v757 = vpack.c.b16 %v597, %v593
    %v758 = vpack.c.b16 %v598, %v594
    %v759 = vpack.c.b16 %v599, %v595
    %v760 = vpack.c.b16 %v600, %v596
    %v761 = vpack.c.b16 %v605, %v601
    %v762 = vpack.c.b16 %v606, %v602
    %v763 = vpack.c.b16 %v607, %v603
    %v764 = vpack.c.b16 %v608, %v604
    %v765 = vpack.c.b16 %v613, %v609
    %v766 = vpack.c.b16 %v614, %v610
    %v767 = vpack.c.b16 %v615, %v611
    %v768 = vpack.c.b16 %v616, %v612
    %v769 = vpack.c.b16 %v621, %v617
    %v770 = vpack.c.b16 %v622, %v618
    %v771 = vpack.c.b16 %v623, %v619
    %v772 = vpack.c.b16 %v624, %v620
    %v773 = vpack.c.b16 %v629, %v625
    %v774 = vpack.c.b16 %v630, %v626
    %v775 = vpack.c.b16 %v631, %v627
    %v776 = vpack.c.b16 %v632, %v628
    %v777 = vpack.c.b16 %v637, %v633
    %v778 = vpack.c.b16 %v638, %v634
    %v779 = vpack.c.b16 %v639, %v635
    %v780 = vpack.c.b16 %v640, %v636
    %v781 = vpack.c.b16 %v645, %v641
    %v782 = vpack.c.b16 %v646, %v642
    %v783 = vpack.c.b16 %v647, %v643
    %v784 = vpack.c.b16 %v648, %v644
    %v785 = vpack.c.b16 %v653, %v649
    %v786 = vpack.c.b16 %v654, %v650
    %v787 = vpack.c.b16 %v655, %v651
    %v788 = vpack.c.b16 %v656, %v652
    %v789 = vpack.c.b16 %v661, %v657
    %v790 = vpack.c.b16 %v662, %v658
    %v791 = vpack.c.b16 %v663, %v659
    %v792 = vpack.c.b16 %v664, %v660
    %921 = vmatprep.subr.bf16.mxu0 %v694
    %922 = vmatpush1.bf16.msra.mxu0 %v693
    %923 = vmatprep.subr.bf16.mxu0 %v690
    %924 = vmatpush1.bf16.msra.mxu0 %v689
    %925 = vmatprep.subr.bf16.mxu0 %v686
    %926 = vmatpush1.bf16.msra.mxu0 %v685
    %927 = vmatprep.subr.bf16.mxu0 %v682
    %928 = vmatpush1.bf16.msra.mxu0 %v681
    %929 = vmatprep.subr.bf16.mxu0 %v678
    %930 = vmatpush1.bf16.msra.mxu0 %v677
    %931 = vmatprep.subr.bf16.mxu0 %v674
    %932 = vmatpush1.bf16.msra.mxu0 %v673
    %933 = vmatprep.subr.bf16.mxu0 %v670
    %934 = vmatpush1.bf16.msra.mxu0 %v669
    %935 = vmatprep.subr.bf16.mxu0 %v666
    %936 = vmatpush1.bf16.msra.mxu0 %v665
    %937 = vmatprep.subr.bf16.mxu0 %v726
    %938 = vmatpush2.bf16.msra.mxu0 %v725
    %939 = vmatprep.subr.bf16.mxu0 %v722
    %940 = vmatpush2.bf16.msra.mxu0 %v721
    %941 = vmatprep.subr.bf16.mxu0 %v718
    %942 = vmatpush2.bf16.msra.mxu0 %v717
    %943 = vmatprep.subr.bf16.mxu0 %v714
    %944 = vmatpush2.bf16.msra.mxu0 %v713
    %945 = vmatprep.subr.bf16.mxu0 %v710
    %946 = vmatpush2.bf16.msra.mxu0 %v709
    %947 = vmatprep.subr.bf16.mxu0 %v706
    %948 = vmatpush2.bf16.msra.mxu0 %v705
    %949 = vmatprep.subr.bf16.mxu0 %v702
    %950 = vmatpush2.bf16.msra.mxu0 %v701
    %951 = vmatprep.subr.bf16.mxu0 %v698
    %952 = vmatpush2.bf16.msra.mxu0 %v697
    %953 = vmatprep.mubr.bf16.mxu0 %v100
    %954 = vmatmul.mubr.bf16.gmra.mxu0 %v99
    %v955 = vpop.f32.mrf.mxu0
    %v956 = vadd.f32 %v264, %v955
    %v957 = vpop.f32.mrf.mxu0
    %v958 = vadd.f32 %v268, %v957
    %v959 = vpop.f32.mrf.mxu0
    %v960 = vadd.f32 %v264, %v959
    %v961 = vpop.f32.mrf.mxu0
    %v962 = vadd.f32 %v268, %v961
    %963 = vmatprep.mubr.bf16.mxu0 %v104
    %964 = vmatmul.mubr.bf16.gmra.mxu0 %v103
    %v965 = vpop.f32.mrf.mxu0
    %v966 = vadd.f32 %v264, %v965
    %v967 = vpop.f32.mrf.mxu0
    %v968 = vadd.f32 %v268, %v967
    %v969 = vpop.f32.mrf.mxu0
    %v970 = vadd.f32 %v264, %v969
    %v971 = vpop.f32.mrf.mxu0
    %v972 = vadd.f32 %v268, %v971
    %973 = vmatprep.mubr.bf16.mxu0 %v108
    %974 = vmatmul.mubr.bf16.gmra.mxu0 %v107
    %v975 = vpop.f32.mrf.mxu0
    %v976 = vadd.f32 %v264, %v975
    %v977 = vpop.f32.mrf.mxu0
    %v978 = vadd.f32 %v268, %v977
    %v979 = vpop.f32.mrf.mxu0
    %v980 = vadd.f32 %v264, %v979
    %v981 = vpop.f32.mrf.mxu0
    %v982 = vadd.f32 %v268, %v981
    %983 = vmatprep.mubr.bf16.mxu0 %v112
    %984 = vmatmul.mubr.bf16.gmra.mxu0 %v111
    %v985 = vpop.f32.mrf.mxu0
    %v986 = vadd.f32 %v264, %v985
    %v987 = vpop.f32.mrf.mxu0
    %v988 = vadd.f32 %v268, %v987
    %v989 = vpop.f32.mrf.mxu0
    %v990 = vadd.f32 %v264, %v989
    %v991 = vpop.f32.mrf.mxu0
    %v992 = vadd.f32 %v268, %v991
    %993 = vmatprep.mubr.bf16.mxu0 %v116
    %994 = vmatmul.mubr.bf16.gmra.mxu0 %v115
    %v995 = vpop.f32.mrf.mxu0
    %v996 = vadd.f32 %v264, %v995
    %v997 = vpop.f32.mrf.mxu0
    %v998 = vadd.f32 %v268, %v997
    %v999 = vpop.f32.mrf.mxu0
    %v1000 = vadd.f32 %v264, %v999
    %v1001 = vpop.f32.mrf.mxu0
    %v1002 = vadd.f32 %v268, %v1001
    %1003 = vmatprep.mubr.bf16.mxu0 %v120
    %1004 = vmatmul.mubr.bf16.gmra.mxu0 %v119
    %v1005 = vpop.f32.mrf.mxu0
    %v1006 = vadd.f32 %v264, %v1005
    %v1007 = vpop.f32.mrf.mxu0
    %v1008 = vadd.f32 %v268, %v1007
    %v1009 = vpop.f32.mrf.mxu0
    %v1010 = vadd.f32 %v264, %v1009
    %v1011 = vpop.f32.mrf.mxu0
    %v1012 = vadd.f32 %v268, %v1011
    %1013 = vmatprep.mubr.bf16.mxu0 %v124
    %1014 = vmatmul.mubr.bf16.gmra.mxu0 %v123
    %v1015 = vpop.f32.mrf.mxu0
    %v1016 = vadd.f32 %v264, %v1015
    %v1017 = vpop.f32.mrf.mxu0
    %v1018 = vadd.f32 %v268, %v1017
    %v1019 = vpop.f32.mrf.mxu0
    %v1020 = vadd.f32 %v264, %v1019
    %v1021 = vpop.f32.mrf.mxu0
    %v1022 = vadd.f32 %v268, %v1021
    %1023 = vmatprep.mubr.bf16.mxu0 %v128
    %1024 = vmatmul.mubr.bf16.gmra.mxu0 %v127
    %v1025 = vpop.f32.mrf.mxu0
    %v1026 = vadd.f32 %v264, %v1025
    %v1027 = vpop.f32.mrf.mxu0
    %v1028 = vadd.f32 %v268, %v1027
    %v1029 = vpop.f32.mrf.mxu0
    %v1030 = vadd.f32 %v264, %v1029
    %v1031 = vpop.f32.mrf.mxu0
    %v1032 = vadd.f32 %v268, %v1031
    %1033 = vdwg.mxu0
    %1034 = vmatprep.subr.bf16.mxu0 %v758
    %1035 = vmatpush1.bf16.msra.mxu0 %v757
    %1036 = vmatprep.subr.bf16.mxu0 %v754
    %1037 = vmatpush1.bf16.msra.mxu0 %v753
    %1038 = vmatprep.subr.bf16.mxu0 %v750
    %1039 = vmatpush1.bf16.msra.mxu0 %v749
    %1040 = vmatprep.subr.bf16.mxu0 %v746
    %1041 = vmatpush1.bf16.msra.mxu0 %v745
    %1042 = vmatprep.subr.bf16.mxu0 %v742
    %1043 = vmatpush1.bf16.msra.mxu0 %v741
    %1044 = vmatprep.subr.bf16.mxu0 %v738
    %1045 = vmatpush1.bf16.msra.mxu0 %v737
    %1046 = vmatprep.subr.bf16.mxu0 %v734
    %1047 = vmatpush1.bf16.msra.mxu0 %v733
    %1048 = vmatprep.subr.bf16.mxu0 %v730
    %1049 = vmatpush1.bf16.msra.mxu0 %v729
    %1050 = vmatprep.subr.bf16.mxu0 %v790
    %1051 = vmatpush2.bf16.msra.mxu0 %v789
    %1052 = vmatprep.subr.bf16.mxu0 %v786
    %1053 = vmatpush2.bf16.msra.mxu0 %v785
    %1054 = vmatprep.subr.bf16.mxu0 %v782
    %1055 = vmatpush2.bf16.msra.mxu0 %v781
    %1056 = vmatprep.subr.bf16.mxu0 %v778
    %1057 = vmatpush2.bf16.msra.mxu0 %v777
    %1058 = vmatprep.subr.bf16.mxu0 %v774
    %1059 = vmatpush2.bf16.msra.mxu0 %v773
    %1060 = vmatprep.subr.bf16.mxu0 %v770
    %1061 = vmatpush2.bf16.msra.mxu0 %v769
    %1062 = vmatprep.subr.bf16.mxu0 %v766
    %1063 = vmatpush2.bf16.msra.mxu0 %v765
    %1064 = vmatprep.subr.bf16.mxu0 %v762
    %1065 = vmatpush2.bf16.msra.mxu0 %v761
    %1066 = vmatprep.mubr.bf16.mxu0 %v102
    %1067 = vmatmul.mubr.bf16.gmra.mxu0 %v101
    %v1068 = vpop.f32.mrf.mxu0
    %v1069 = vadd.f32 %v956, %v1068
    %v1070 = vpop.f32.mrf.mxu0
    %v1071 = vadd.f32 %v958, %v1070
    %v1072 = vpop.f32.mrf.mxu0
    %v1073 = vadd.f32 %v960, %v1072
    %v1074 = vpop.f32.mrf.mxu0
    %v1075 = vadd.f32 %v962, %v1074
    %1076 = vmatprep.mubr.bf16.mxu0 %v106
    %1077 = vmatmul.mubr.bf16.gmra.mxu0 %v105
    %v1078 = vpop.f32.mrf.mxu0
    %v1079 = vadd.f32 %v966, %v1078
    %v1080 = vpop.f32.mrf.mxu0
    %v1081 = vadd.f32 %v968, %v1080
    %v1082 = vpop.f32.mrf.mxu0
    %v1083 = vadd.f32 %v970, %v1082
    %v1084 = vpop.f32.mrf.mxu0
    %v1085 = vadd.f32 %v972, %v1084
    %1086 = vmatprep.mubr.bf16.mxu0 %v110
    %1087 = vmatmul.mubr.bf16.gmra.mxu0 %v109
    %v1088 = vpop.f32.mrf.mxu0
    %v1089 = vadd.f32 %v976, %v1088
    %v1090 = vpop.f32.mrf.mxu0
    %v1091 = vadd.f32 %v978, %v1090
    %v1092 = vpop.f32.mrf.mxu0
    %v1093 = vadd.f32 %v980, %v1092
    %v1094 = vpop.f32.mrf.mxu0
    %v1095 = vadd.f32 %v982, %v1094
    %1096 = vmatprep.mubr.bf16.mxu0 %v114
    %1097 = vmatmul.mubr.bf16.gmra.mxu0 %v113
    %v1098 = vpop.f32.mrf.mxu0
    %v1099 = vadd.f32 %v986, %v1098
    %v1100 = vpop.f32.mrf.mxu0
    %v1101 = vadd.f32 %v988, %v1100
    %v1102 = vpop.f32.mrf.mxu0
    %v1103 = vadd.f32 %v990, %v1102
    %v1104 = vpop.f32.mrf.mxu0
    %v1105 = vadd.f32 %v992, %v1104
    %1106 = vmatprep.mubr.bf16.mxu0 %v118
    %1107 = vmatmul.mubr.bf16.gmra.mxu0 %v117
    %v1108 = vpop.f32.mrf.mxu0
    %v1109 = vadd.f32 %v996, %v1108
    %v1110 = vpop.f32.mrf.mxu0
    %v1111 = vadd.f32 %v998, %v1110
    %v1112 = vpop.f32.mrf.mxu0
    %v1113 = vadd.f32 %v1000, %v1112
    %v1114 = vpop.f32.mrf.mxu0
    %v1115 = vadd.f32 %v1002, %v1114
    %1116 = vmatprep.mubr.bf16.mxu0 %v122
    %1117 = vmatmul.mubr.bf16.gmra.mxu0 %v121
    %v1118 = vpop.f32.mrf.mxu0
    %v1119 = vadd.f32 %v1006, %v1118
    %v1120 = vpop.f32.mrf.mxu0
    %v1121 = vadd.f32 %v1008, %v1120
    %v1122 = vpop.f32.mrf.mxu0
    %v1123 = vadd.f32 %v1010, %v1122
    %v1124 = vpop.f32.mrf.mxu0
    %v1125 = vadd.f32 %v1012, %v1124
    %1126 = vmatprep.mubr.bf16.mxu0 %v126
    %1127 = vmatmul.mubr.bf16.gmra.mxu0 %v125
    %v1128 = vpop.f32.mrf.mxu0
    %v1129 = vadd.f32 %v1016, %v1128
    %v1130 = vpop.f32.mrf.mxu0
    %v1131 = vadd.f32 %v1018, %v1130
    %v1132 = vpop.f32.mrf.mxu0
    %v1133 = vadd.f32 %v1020, %v1132
    %v1134 = vpop.f32.mrf.mxu0
    %v1135 = vadd.f32 %v1022, %v1134
    %1136 = vmatprep.mubr.bf16.mxu0 %v130
    %1137 = vmatmul.mubr.bf16.gmra.mxu0 %v129
    %v1138 = vpop.f32.mrf.mxu0
    %v1139 = vadd.f32 %v1026, %v1138
    %v1140 = vpop.f32.mrf.mxu0
    %v1141 = vadd.f32 %v1028, %v1140
    %v1142 = vpop.f32.mrf.mxu0
    %v1143 = vadd.f32 %v1030, %v1142
    %v1144 = vpop.f32.mrf.mxu0
    %v1145 = vadd.f32 %v1032, %v1144
    %1146 = vdwg.mxu0
    %1147 = vmatprep.subr.bf16.mxu0 %v696
    %1148 = vmatpush1.bf16.msra.mxu0 %v695
    %1149 = vmatprep.subr.bf16.mxu0 %v692
    %1150 = vmatpush1.bf16.msra.mxu0 %v691
    %1151 = vmatprep.subr.bf16.mxu0 %v688
    %1152 = vmatpush1.bf16.msra.mxu0 %v687
    %1153 = vmatprep.subr.bf16.mxu0 %v684
    %1154 = vmatpush1.bf16.msra.mxu0 %v683
    %1155 = vmatprep.subr.bf16.mxu0 %v680
    %1156 = vmatpush1.bf16.msra.mxu0 %v679
    %1157 = vmatprep.subr.bf16.mxu0 %v676
    %1158 = vmatpush1.bf16.msra.mxu0 %v675
    %1159 = vmatprep.subr.bf16.mxu0 %v672
    %1160 = vmatpush1.bf16.msra.mxu0 %v671
    %1161 = vmatprep.subr.bf16.mxu0 %v668
    %1162 = vmatpush1.bf16.msra.mxu0 %v667
    %1163 = vmatprep.subr.bf16.mxu0 %v728
    %1164 = vmatpush2.bf16.msra.mxu0 %v727
    %1165 = vmatprep.subr.bf16.mxu0 %v724
    %1166 = vmatpush2.bf16.msra.mxu0 %v723
    %1167 = vmatprep.subr.bf16.mxu0 %v720
    %1168 = vmatpush2.bf16.msra.mxu0 %v719
    %1169 = vmatprep.subr.bf16.mxu0 %v716
    %1170 = vmatpush2.bf16.msra.mxu0 %v715
    %1171 = vmatprep.subr.bf16.mxu0 %v712
    %1172 = vmatpush2.bf16.msra.mxu0 %v711
    %1173 = vmatprep.subr.bf16.mxu0 %v708
    %1174 = vmatpush2.bf16.msra.mxu0 %v707
    %1175 = vmatprep.subr.bf16.mxu0 %v704
    %1176 = vmatpush2.bf16.msra.mxu0 %v703
    %1177 = vmatprep.subr.bf16.mxu0 %v700
    %1178 = vmatpush2.bf16.msra.mxu0 %v699
    %1179 = vmatprep.mubr.bf16.mxu0 %v100
    %1180 = vmatmul.mubr.bf16.gmra.mxu0 %v99
    %v1181 = vpop.f32.mrf.mxu0
    %v1182 = vadd.f32 %v272, %v1181
    %v1183 = vpop.f32.mrf.mxu0
    %v1184 = vadd.f32 %v276, %v1183
    %v1185 = vpop.f32.mrf.mxu0
    %v1186 = vadd.f32 %v272, %v1185
    %v1187 = vpop.f32.mrf.mxu0
    %v1188 = vadd.f32 %v276, %v1187
    %1189 = vmatprep.mubr.bf16.mxu0 %v104
    %1190 = vmatmul.mubr.bf16.gmra.mxu0 %v103
    %v1191 = vpop.f32.mrf.mxu0
    %v1192 = vadd.f32 %v272, %v1191
    %v1193 = vpop.f32.mrf.mxu0
    %v1194 = vadd.f32 %v276, %v1193
    %v1195 = vpop.f32.mrf.mxu0
    %v1196 = vadd.f32 %v272, %v1195
    %v1197 = vpop.f32.mrf.mxu0
    %v1198 = vadd.f32 %v276, %v1197
    %1199 = vmatprep.mubr.bf16.mxu0 %v108
    %1200 = vmatmul.mubr.bf16.gmra.mxu0 %v107
    %v1201 = vpop.f32.mrf.mxu0
    %v1202 = vadd.f32 %v272, %v1201
    %v1203 = vpop.f32.mrf.mxu0
    %v1204 = vadd.f32 %v276, %v1203
    %v1205 = vpop.f32.mrf.mxu0
    %v1206 = vadd.f32 %v272, %v1205
    %v1207 = vpop.f32.mrf.mxu0
    %v1208 = vadd.f32 %v276, %v1207
    %1209 = vmatprep.mubr.bf16.mxu0 %v112
    %1210 = vmatmul.mubr.bf16.gmra.mxu0 %v111
    %v1211 = vpop.f32.mrf.mxu0
    %v1212 = vadd.f32 %v272, %v1211
    %v1213 = vpop.f32.mrf.mxu0
    %v1214 = vadd.f32 %v276, %v1213
    %v1215 = vpop.f32.mrf.mxu0
    %v1216 = vadd.f32 %v272, %v1215
    %v1217 = vpop.f32.mrf.mxu0
    %v1218 = vadd.f32 %v276, %v1217
    %1219 = vmatprep.mubr.bf16.mxu0 %v116
    %1220 = vmatmul.mubr.bf16.gmra.mxu0 %v115
    %v1221 = vpop.f32.mrf.mxu0
    %v1222 = vadd.f32 %v272, %v1221
    %v1223 = vpop.f32.mrf.mxu0
    %v1224 = vadd.f32 %v276, %v1223
    %v1225 = vpop.f32.mrf.mxu0
    %v1226 = vadd.f32 %v272, %v1225
    %v1227 = vpop.f32.mrf.mxu0
    %v1228 = vadd.f32 %v276, %v1227
    %1229 = vmatprep.mubr.bf16.mxu0 %v120
    %1230 = vmatmul.mubr.bf16.gmra.mxu0 %v119
    %v1231 = vpop.f32.mrf.mxu0
    %v1232 = vadd.f32 %v272, %v1231
    %v1233 = vpop.f32.mrf.mxu0
    %v1234 = vadd.f32 %v276, %v1233
    %v1235 = vpop.f32.mrf.mxu0
    %v1236 = vadd.f32 %v272, %v1235
    %v1237 = vpop.f32.mrf.mxu0
    %v1238 = vadd.f32 %v276, %v1237
    %1239 = vmatprep.mubr.bf16.mxu0 %v124
    %1240 = vmatmul.mubr.bf16.gmra.mxu0 %v123
    %v1241 = vpop.f32.mrf.mxu0
    %v1242 = vadd.f32 %v272, %v1241
    %v1243 = vpop.f32.mrf.mxu0
    %v1244 = vadd.f32 %v276, %v1243
    %v1245 = vpop.f32.mrf.mxu0
    %v1246 = vadd.f32 %v272, %v1245
    %v1247 = vpop.f32.mrf.mxu0
    %v1248 = vadd.f32 %v276, %v1247
    %1249 = vmatprep.mubr.bf16.mxu0 %v128
    %1250 = vmatmul.mubr.bf16.gmra.mxu0 %v127
    %v1251 = vpop.f32.mrf.mxu0
    %v1252 = vadd.f32 %v272, %v1251
    %v1253 = vpop.f32.mrf.mxu0
    %v1254 = vadd.f32 %v276, %v1253
    %v1255 = vpop.f32.mrf.mxu0
    %v1256 = vadd.f32 %v272, %v1255
    %v1257 = vpop.f32.mrf.mxu0
    %v1258 = vadd.f32 %v276, %v1257
    %1259 = vdwg.mxu0
    %1260 = vmatprep.subr.bf16.mxu0 %v760
    %1261 = vmatpush1.bf16.msra.mxu0 %v759
    %1262 = vmatprep.subr.bf16.mxu0 %v756
    %1263 = vmatpush1.bf16.msra.mxu0 %v755
    %1264 = vmatprep.subr.bf16.mxu0 %v752
    %1265 = vmatpush1.bf16.msra.mxu0 %v751
    %1266 = vmatprep.subr.bf16.mxu0 %v748
    %1267 = vmatpush1.bf16.msra.mxu0 %v747
    %1268 = vmatprep.subr.bf16.mxu0 %v744
    %1269 = vmatpush1.bf16.msra.mxu0 %v743
    %1270 = vmatprep.subr.bf16.mxu0 %v740
    %1271 = vmatpush1.bf16.msra.mxu0 %v739
    %1272 = vmatprep.subr.bf16.mxu0 %v736
    %1273 = vmatpush1.bf16.msra.mxu0 %v735
    %1274 = vmatprep.subr.bf16.mxu0 %v732
    %1275 = vmatpush1.bf16.msra.mxu0 %v731
    %1276 = vmatprep.subr.bf16.mxu0 %v792
    %1277 = vmatpush2.bf16.msra.mxu0 %v791
    %1278 = vmatprep.subr.bf16.mxu0 %v788
    %1279 = vmatpush2.bf16.msra.mxu0 %v787
    %1280 = vmatprep.subr.bf16.mxu0 %v784
    %1281 = vmatpush2.bf16.msra.mxu0 %v783
    %1282 = vmatprep.subr.bf16.mxu0 %v780
    %1283 = vmatpush2.bf16.msra.mxu0 %v779
    %1284 = vmatprep.subr.bf16.mxu0 %v776
    %1285 = vmatpush2.bf16.msra.mxu0 %v775
    %1286 = vmatprep.subr.bf16.mxu0 %v772
    %1287 = vmatpush2.bf16.msra.mxu0 %v771
    %1288 = vmatprep.subr.bf16.mxu0 %v768
    %1289 = vmatpush2.bf16.msra.mxu0 %v767
    %1290 = vmatprep.subr.bf16.mxu0 %v764
    %1291 = vmatpush2.bf16.msra.mxu0 %v763
    %1292 = vmatprep.mubr.bf16.mxu0 %v102
    %1293 = vmatmul.mubr.bf16.gmra.mxu0 %v101
    %v1294 = vpop.f32.mrf.mxu0
    %v1295 = vadd.f32 %v1182, %v1294
    %v1296 = vpop.f32.mrf.mxu0
    %v1297 = vadd.f32 %v1184, %v1296
    %v1298 = vpop.f32.mrf.mxu0
    %v1299 = vadd.f32 %v1186, %v1298
    %v1300 = vpop.f32.mrf.mxu0
    %v1301 = vadd.f32 %v1188, %v1300
    %1302 = vmatprep.mubr.bf16.mxu0 %v106
    %1303 = vmatmul.mubr.bf16.gmra.mxu0 %v105
    %v1304 = vpop.f32.mrf.mxu0
    %v1305 = vadd.f32 %v1192, %v1304
    %v1306 = vpop.f32.mrf.mxu0
    %v1307 = vadd.f32 %v1194, %v1306
    %v1308 = vpop.f32.mrf.mxu0
    %v1309 = vadd.f32 %v1196, %v1308
    %v1310 = vpop.f32.mrf.mxu0
    %v1311 = vadd.f32 %v1198, %v1310
    %1312 = vmatprep.mubr.bf16.mxu0 %v110
    %1313 = vmatmul.mubr.bf16.gmra.mxu0 %v109
    %v1314 = vpop.f32.mrf.mxu0
    %v1315 = vadd.f32 %v1202, %v1314
    %v1316 = vpop.f32.mrf.mxu0
    %v1317 = vadd.f32 %v1204, %v1316
    %v1318 = vpop.f32.mrf.mxu0
    %v1319 = vadd.f32 %v1206, %v1318
    %v1320 = vpop.f32.mrf.mxu0
    %v1321 = vadd.f32 %v1208, %v1320
    %1322 = vmatprep.mubr.bf16.mxu0 %v114
    %1323 = vmatmul.mubr.bf16.gmra.mxu0 %v113
    %v1324 = vpop.f32.mrf.mxu0
    %v1325 = vadd.f32 %v1212, %v1324
    %v1326 = vpop.f32.mrf.mxu0
    %v1327 = vadd.f32 %v1214, %v1326
    %v1328 = vpop.f32.mrf.mxu0
    %v1329 = vadd.f32 %v1216, %v1328
    %v1330 = vpop.f32.mrf.mxu0
    %v1331 = vadd.f32 %v1218, %v1330
    %1332 = vmatprep.mubr.bf16.mxu0 %v118
    %1333 = vmatmul.mubr.bf16.gmra.mxu0 %v117
    %v1334 = vpop.f32.mrf.mxu0
    %v1335 = vadd.f32 %v1222, %v1334
    %v1336 = vpop.f32.mrf.mxu0
    %v1337 = vadd.f32 %v1224, %v1336
    %v1338 = vpop.f32.mrf.mxu0
    %v1339 = vadd.f32 %v1226, %v1338
    %v1340 = vpop.f32.mrf.mxu0
    %v1341 = vadd.f32 %v1228, %v1340
    %1342 = vmatprep.mubr.bf16.mxu0 %v122
    %1343 = vmatmul.mubr.bf16.gmra.mxu0 %v121
    %v1344 = vpop.f32.mrf.mxu0
    %v1345 = vadd.f32 %v1232, %v1344
    %v1346 = vpop.f32.mrf.mxu0
    %v1347 = vadd.f32 %v1234, %v1346
    %v1348 = vpop.f32.mrf.mxu0
    %v1349 = vadd.f32 %v1236, %v1348
    %v1350 = vpop.f32.mrf.mxu0
    %v1351 = vadd.f32 %v1238, %v1350
    %1352 = vmatprep.mubr.bf16.mxu0 %v126
    %1353 = vmatmul.mubr.bf16.gmra.mxu0 %v125
    %v1354 = vpop.f32.mrf.mxu0
    %v1355 = vadd.f32 %v1242, %v1354
    %v1356 = vpop.f32.mrf.mxu0
    %v1357 = vadd.f32 %v1244, %v1356
    %v1358 = vpop.f32.mrf.mxu0
    %v1359 = vadd.f32 %v1246, %v1358
    %v1360 = vpop.f32.mrf.mxu0
    %v1361 = vadd.f32 %v1248, %v1360
    %1362 = vmatprep.mubr.bf16.mxu0 %v130
    %1363 = vmatmul.mubr.bf16.gmra.mxu0 %v129
    %v1364 = vpop.f32.mrf.mxu0
    %v1365 = vadd.f32 %v1252, %v1364
    %v1366 = vpop.f32.mrf.mxu0
    %v1367 = vadd.f32 %v1254, %v1366
    %v1368 = vpop.f32.mrf.mxu0
    %v1369 = vadd.f32 %v1256, %v1368
    %v1370 = vpop.f32.mrf.mxu0
    %v1371 = vadd.f32 %v1258, %v1370
    %1372 = vdwg.mxu0
    %v1373 = vmax.f32 %v1069, 0.0
    %v1374 = vmax.f32 %v1071, 0.0
    %v1375 = vmax.f32 %v1295, 0.0
    %v1376 = vmax.f32 %v1297, 0.0
    %v1377 = vmax.f32 %v1073, 0.0
    %v1378 = vmax.f32 %v1075, 0.0
    %v1379 = vmax.f32 %v1299, 0.0
    %v1380 = vmax.f32 %v1301, 0.0
    %v1381 = vmax.f32 %v1079, 0.0
    %v1382 = vmax.f32 %v1081, 0.0
    %v1383 = vmax.f32 %v1305, 0.0
    %v1384 = vmax.f32 %v1307, 0.0
    %v1385 = vmax.f32 %v1083, 0.0
    %v1386 = vmax.f32 %v1085, 0.0
    %v1387 = vmax.f32 %v1309, 0.0
    %v1388 = vmax.f32 %v1311, 0.0
    %v1389 = vmax.f32 %v1089, 0.0
    %v1390 = vmax.f32 %v1091, 0.0
    %v1391 = vmax.f32 %v1315, 0.0
    %v1392 = vmax.f32 %v1317, 0.0
    %v1393 = vmax.f32 %v1093, 0.0
    %v1394 = vmax.f32 %v1095, 0.0
    %v1395 = vmax.f32 %v1319, 0.0
    %v1396 = vmax.f32 %v1321, 0.0
    %v1397 = vmax.f32 %v1099, 0.0
    %v1398 = vmax.f32 %v1101, 0.0
    %v1399 = vmax.f32 %v1325, 0.0
    %v1400 = vmax.f32 %v1327, 0.0
    %v1401 = vmax.f32 %v1103, 0.0
    %v1402 = vmax.f32 %v1105, 0.0
    %v1403 = vmax.f32 %v1329, 0.0
    %v1404 = vmax.f32 %v1331, 0.0
    %v1405 = vmax.f32 %v1109, 0.0
    %v1406 = vmax.f32 %v1111, 0.0
    %v1407 = vmax.f32 %v1335, 0.0
    %v1408 = vmax.f32 %v1337, 0.0
    %v1409 = vmax.f32 %v1113, 0.0
    %v1410 = vmax.f32 %v1115, 0.0
    %v1411 = vmax.f32 %v1339, 0.0
    %v1412 = vmax.f32 %v1341, 0.0
    %v1413 = vmax.f32 %v1119, 0.0
    %v1414 = vmax.f32 %v1121, 0.0
    %v1415 = vmax.f32 %v1345, 0.0
    %v1416 = vmax.f32 %v1347, 0.0
    %v1417 = vmax.f32 %v1123, 0.0
    %v1418 = vmax.f32 %v1125, 0.0
    %v1419 = vmax.f32 %v1349, 0.0
    %v1420 = vmax.f32 %v1351, 0.0
    %v1421 = vmax.f32 %v1129, 0.0
    %v1422 = vmax.f32 %v1131, 0.0
    %v1423 = vmax.f32 %v1355, 0.0
    %v1424 = vmax.f32 %v1357, 0.0
    %v1425 = vmax.f32 %v1133, 0.0
    %v1426 = vmax.f32 %v1135, 0.0
    %v1427 = vmax.f32 %v1359, 0.0
    %v1428 = vmax.f32 %v1361, 0.0
    %v1429 = vmax.f32 %v1139, 0.0
    %v1430 = vmax.f32 %v1141, 0.0
    %v1431 = vmax.f32 %v1365, 0.0
    %v1432 = vmax.f32 %v1367, 0.0
    %v1433 = vmax.f32 %v1143, 0.0
    %v1434 = vmax.f32 %v1145, 0.0
    %v1435 = vmax.f32 %v1369, 0.0
    %v1436 = vmax.f32 %v1371, 0.0
    %v1437 = vpack.c.bf16 %v1377, %v1373
    %v1438 = vpack.c.bf16 %v1378, %v1374
    %v1439 = vpack.c.bf16 %v1379, %v1375
    %v1440 = vpack.c.bf16 %v1380, %v1376
    %v1441 = vpack.c.bf16 %v1385, %v1381
    %v1442 = vpack.c.bf16 %v1386, %v1382
    %v1443 = vpack.c.bf16 %v1387, %v1383
    %v1444 = vpack.c.bf16 %v1388, %v1384
    %v1445 = vpack.c.bf16 %v1393, %v1389
    %v1446 = vpack.c.bf16 %v1394, %v1390
    %v1447 = vpack.c.bf16 %v1395, %v1391
    %v1448 = vpack.c.bf16 %v1396, %v1392
    %v1449 = vpack.c.bf16 %v1401, %v1397
    %v1450 = vpack.c.bf16 %v1402, %v1398
    %v1451 = vpack.c.bf16 %v1403, %v1399
    %v1452 = vpack.c.bf16 %v1404, %v1400
    %v1453 = vpack.c.bf16 %v1409, %v1405
    %v1454 = vpack.c.bf16 %v1410, %v1406
    %v1455 = vpack.c.bf16 %v1411, %v1407
    %v1456 = vpack.c.bf16 %v1412, %v1408
    %v1457 = vpack.c.bf16 %v1417, %v1413
    %v1458 = vpack.c.bf16 %v1418, %v1414
    %v1459 = vpack.c.bf16 %v1419, %v1415
    %v1460 = vpack.c.bf16 %v1420, %v1416
    %v1461 = vpack.c.bf16 %v1425, %v1421
    %v1462 = vpack.c.bf16 %v1426, %v1422
    %v1463 = vpack.c.bf16 %v1427, %v1423
    %v1464 = vpack.c.bf16 %v1428, %v1424
    %v1465 = vpack.c.bf16 %v1433, %v1429
    %v1466 = vpack.c.bf16 %v1434, %v1430
    %v1467 = vpack.c.bf16 %v1435, %v1431
    %v1468 = vpack.c.bf16 %v1436, %v1432
    %v1469 = vld [vmem:[%s3] sm:$0xf]
    %v1470 = vld [vmem:[%s3 + $0x4] sm:$0xf]
    %v1471 = vld [vmem:[%s3 + $0x8] sm:$0xf]
    %v1472 = vld [vmem:[%s3 + $0xc] sm:$0xf]
    %v1473 = vld [vmem:[%s3 + $0x10] sm:$0xf]
    %v1474 = vld [vmem:[%s3 + $0x14] sm:$0xf]
    %v1475 = vld [vmem:[%s3 + $0x18] sm:$0xf]
    %v1476 = vld [vmem:[%s3 + $0x1c] sm:$0xf]
    %v1477 = vld [vmem:[%s3 + $0x20] sm:$0xf]
    %v1478 = vld [vmem:[%s3 + $0x24] sm:$0xf]
    %v1479 = vld [vmem:[%s3 + $0x28] sm:$0xf]
    %v1480 = vld [vmem:[%s3 + $0x2c] sm:$0xf]
    %v1481 = vld [vmem:[%s3 + $0x30] sm:$0xf]
    %v1482 = vld [vmem:[%s3 + $0x34] sm:$0xf]
    %v1483 = vld [vmem:[%s3 + $0x38] sm:$0xf]
    %v1484 = vld [vmem:[%s3 + $0x3c] sm:$0xf]
    %v1485 = vld [vmem:[%s3 + $0x40] sm:$0xf]
    %v1486 = vld [vmem:[%s3 + $0x44] sm:$0xf]
    %v1487 = vld [vmem:[%s3 + $0x48] sm:$0xf]
    %v1488 = vld [vmem:[%s3 + $0x4c] sm:$0xf]
    %v1489 = vld [vmem:[%s3 + $0x50] sm:$0xf]
    %v1490 = vld [vmem:[%s3 + $0x54] sm:$0xf]
    %v1491 = vld [vmem:[%s3 + $0x58] sm:$0xf]
    %v1492 = vld [vmem:[%s3 + $0x5c] sm:$0xf]
    %v1493 = vld [vmem:[%s3 + $0x60] sm:$0xf]
    %v1494 = vld [vmem:[%s3 + $0x64] sm:$0xf]
    %v1495 = vld [vmem:[%s3 + $0x68] sm:$0xf]
    %v1496 = vld [vmem:[%s3 + $0x6c] sm:$0xf]
    %v1497 = vld [vmem:[%s3 + $0x70] sm:$0xf]
    %v1498 = vld [vmem:[%s3 + $0x74] sm:$0xf]
    %v1499 = vld [vmem:[%s3 + $0x78] sm:$0xf]
    %v1500 = vld [vmem:[%s3 + $0x7c] sm:$0xf]
    %v1501 = vld [vmem:[%s3 + $0x80] sm:$0xf]
    %v1502 = vld [vmem:[%s3 + $0x84] sm:$0xf]
    %v1503 = vld [vmem:[%s3 + $0x88] sm:$0xf]
    %v1504 = vld [vmem:[%s3 + $0x8c] sm:$0xf]
    %v1505 = vld [vmem:[%s3 + $0x90] sm:$0xf]
    %v1506 = vld [vmem:[%s3 + $0x94] sm:$0xf]
    %v1507 = vld [vmem:[%s3 + $0x98] sm:$0xf]
    %v1508 = vld [vmem:[%s3 + $0x9c] sm:$0xf]
    %v1509 = vld [vmem:[%s3 + $0xa0] sm:$0xf]
    %v1510 = vld [vmem:[%s3 + $0xa4] sm:$0xf]
    %v1511 = vld [vmem:[%s3 + $0xa8] sm:$0xf]
    %v1512 = vld [vmem:[%s3 + $0xac] sm:$0xf]
    %v1513 = vld [vmem:[%s3 + $0xb0] sm:$0xf]
    %v1514 = vld [vmem:[%s3 + $0xb4] sm:$0xf]
    %v1515 = vld [vmem:[%s3 + $0xb8] sm:$0xf]
    %v1516 = vld [vmem:[%s3 + $0xbc] sm:$0xf]
    %v1517 = vld [vmem:[%s3 + $0xc0] sm:$0xf]
    %v1518 = vld [vmem:[%s3 + $0xc4] sm:$0xf]
    %v1519 = vld [vmem:[%s3 + $0xc8] sm:$0xf]
    %v1520 = vld [vmem:[%s3 + $0xcc] sm:$0xf]
    %v1521 = vld [vmem:[%s3 + $0xd0] sm:$0xf]
    %v1522 = vld [vmem:[%s3 + $0xd4] sm:$0xf]
    %v1523 = vld [vmem:[%s3 + $0xd8] sm:$0xf]
    %v1524 = vld [vmem:[%s3 + $0xdc] sm:$0xf]
    %v1525 = vld [vmem:[%s3 + $0xe0] sm:$0xf]
    %v1526 = vld [vmem:[%s3 + $0xe4] sm:$0xf]
    %v1527 = vld [vmem:[%s3 + $0xe8] sm:$0xf]
    %v1528 = vld [vmem:[%s3 + $0xec] sm:$0xf]
    %v1529 = vld [vmem:[%s3 + $0xf0] sm:$0xf]
    %v1530 = vld [vmem:[%s3 + $0xf4] sm:$0xf]
    %v1531 = vld [vmem:[%s3 + $0xf8] sm:$0xf]
    %v1532 = vld [vmem:[%s3 + $0xfc] sm:$0xf]
    %v1533 = vld [vmem:[%s4] sm:$0x1]
    %v1535 = vlaneseq
    %v1536 = vshrl.u32 %v1535, 7
    %v1537 = vsub.s32 0, %v1536
    %v1538 = vrot.slane %v1533, %v1537
    %v1604 = vunpack.c.l.b16 %v1469
    %v1605 = vunpack.c.l.b16 %v1470
    %v1606 = vunpack.c.l.b16 %v1471
    %v1607 = vunpack.c.l.b16 %v1472
    %v1608 = vunpack.c.l.b16 %v1473
    %v1609 = vunpack.c.l.b16 %v1474
    %v1610 = vunpack.c.l.b16 %v1475
    %v1611 = vunpack.c.l.b16 %v1476
    %v1612 = vunpack.c.l.b16 %v1477
    %v1613 = vunpack.c.l.b16 %v1478
    %v1614 = vunpack.c.l.b16 %v1479
    %v1615 = vunpack.c.l.b16 %v1480
    %v1616 = vunpack.c.l.b16 %v1481
    %v1617 = vunpack.c.l.b16 %v1482
    %v1618 = vunpack.c.l.b16 %v1483
    %v1619 = vunpack.c.l.b16 %v1484
    %v1620 = vunpack.c.l.b16 %v1485
    %v1621 = vunpack.c.l.b16 %v1486
    %v1622 = vunpack.c.l.b16 %v1487
    %v1623 = vunpack.c.l.b16 %v1488
    %v1624 = vunpack.c.l.b16 %v1489
    %v1625 = vunpack.c.l.b16 %v1490
    %v1626 = vunpack.c.l.b16 %v1491
    %v1627 = vunpack.c.l.b16 %v1492
    %v1628 = vunpack.c.l.b16 %v1493
    %v1629 = vunpack.c.l.b16 %v1494
    %v1630 = vunpack.c.l.b16 %v1495
    %v1631 = vunpack.c.l.b16 %v1496
    %v1632 = vunpack.c.l.b16 %v1497
    %v1633 = vunpack.c.l.b16 %v1498
    %v1634 = vunpack.c.l.b16 %v1499
    %v1635 = vunpack.c.l.b16 %v1500
    %v1636 = vunpack.c.l.b16 %v1501
    %v1637 = vunpack.c.l.b16 %v1502
    %v1638 = vunpack.c.l.b16 %v1503
    %v1639 = vunpack.c.l.b16 %v1504
    %v1640 = vunpack.c.l.b16 %v1505
    %v1641 = vunpack.c.l.b16 %v1506
    %v1642 = vunpack.c.l.b16 %v1507
    %v1643 = vunpack.c.l.b16 %v1508
    %v1644 = vunpack.c.l.b16 %v1509
    %v1645 = vunpack.c.l.b16 %v1510
    %v1646 = vunpack.c.l.b16 %v1511
    %v1647 = vunpack.c.l.b16 %v1512
    %v1648 = vunpack.c.l.b16 %v1513
    %v1649 = vunpack.c.l.b16 %v1514
    %v1650 = vunpack.c.l.b16 %v1515
    %v1651 = vunpack.c.l.b16 %v1516
    %v1652 = vunpack.c.l.b16 %v1517
    %v1653 = vunpack.c.l.b16 %v1518
    %v1654 = vunpack.c.l.b16 %v1519
    %v1655 = vunpack.c.l.b16 %v1520
    %v1656 = vunpack.c.l.b16 %v1521
    %v1657 = vunpack.c.l.b16 %v1522
    %v1658 = vunpack.c.l.b16 %v1523
    %v1659 = vunpack.c.l.b16 %v1524
    %v1660 = vunpack.c.l.b16 %v1525
    %v1661 = vunpack.c.l.b16 %v1526
    %v1662 = vunpack.c.l.b16 %v1527
    %v1663 = vunpack.c.l.b16 %v1528
    %v1664 = vunpack.c.l.b16 %v1529
    %v1665 = vunpack.c.l.b16 %v1530
    %v1666 = vunpack.c.l.b16 %v1531
    %v1667 = vunpack.c.l.b16 %v1532
    %v1668 = vpack.c.b16 %v1605, %v1604
    %v1669 = vpack.c.b16 %v1607, %v1606
    %v1670 = vpack.c.b16 %v1609, %v1608
    %v1671 = vpack.c.b16 %v1611, %v1610
    %v1672 = vpack.c.b16 %v1613, %v1612
    %v1673 = vpack.c.b16 %v1615, %v1614
    %v1674 = vpack.c.b16 %v1617, %v1616
    %v1675 = vpack.c.b16 %v1619, %v1618
    %v1676 = vpack.c.b16 %v1621, %v1620
    %v1677 = vpack.c.b16 %v1623, %v1622
    %v1678 = vpack.c.b16 %v1625, %v1624
    %v1679 = vpack.c.b16 %v1627, %v1626
    %v1680 = vpack.c.b16 %v1629, %v1628
    %v1681 = vpack.c.b16 %v1631, %v1630
    %v1682 = vpack.c.b16 %v1633, %v1632
    %v1683 = vpack.c.b16 %v1635, %v1634
    %v1684 = vpack.c.b16 %v1637, %v1636
    %v1685 = vpack.c.b16 %v1639, %v1638
    %v1686 = vpack.c.b16 %v1641, %v1640
    %v1687 = vpack.c.b16 %v1643, %v1642
    %v1688 = vpack.c.b16 %v1645, %v1644
    %v1689 = vpack.c.b16 %v1647, %v1646
    %v1690 = vpack.c.b16 %v1649, %v1648
    %v1691 = vpack.c.b16 %v1651, %v1650
    %v1692 = vpack.c.b16 %v1653, %v1652
    %v1693 = vpack.c.b16 %v1655, %v1654
    %v1694 = vpack.c.b16 %v1657, %v1656
    %v1695 = vpack.c.b16 %v1659, %v1658
    %v1696 = vpack.c.b16 %v1661, %v1660
    %v1697 = vpack.c.b16 %v1663, %v1662
    %v1698 = vpack.c.b16 %v1665, %v1664
    %v1699 = vpack.c.b16 %v1667, %v1666
    %1732 = vmatprep.subr.bf16.mxu0 0
    %1733 = vmatpush1.bf16.msra.mxu0 %v1675
    %1734 = vmatprep.subr.bf16.mxu0 0
    %1735 = vmatpush1.bf16.msra.mxu0 %v1674
    %1736 = vmatprep.subr.bf16.mxu0 0
    %1737 = vmatpush1.bf16.msra.mxu0 %v1673
    %1738 = vmatprep.subr.bf16.mxu0 0
    %1739 = vmatpush1.bf16.msra.mxu0 %v1672
    %1740 = vmatprep.subr.bf16.mxu0 0
    %1741 = vmatpush1.bf16.msra.mxu0 %v1671
    %1742 = vmatprep.subr.bf16.mxu0 0
    %1743 = vmatpush1.bf16.msra.mxu0 %v1670
    %1744 = vmatprep.subr.bf16.mxu0 0
    %1745 = vmatpush1.bf16.msra.mxu0 %v1669
    %1746 = vmatprep.subr.bf16.mxu0 0
    %1747 = vmatpush1.bf16.msra.mxu0 %v1668
    %1748 = vmatprep.subr.bf16.mxu0 0
    %1749 = vmatpush2.bf16.msra.mxu0 %v1683
    %1750 = vmatprep.subr.bf16.mxu0 0
    %1751 = vmatpush2.bf16.msra.mxu0 %v1682
    %1752 = vmatprep.subr.bf16.mxu0 0
    %1753 = vmatpush2.bf16.msra.mxu0 %v1681
    %1754 = vmatprep.subr.bf16.mxu0 0
    %1755 = vmatpush2.bf16.msra.mxu0 %v1680
    %1756 = vmatprep.subr.bf16.mxu0 0
    %1757 = vmatpush2.bf16.msra.mxu0 %v1679
    %1758 = vmatprep.subr.bf16.mxu0 0
    %1759 = vmatpush2.bf16.msra.mxu0 %v1678
    %1760 = vmatprep.subr.bf16.mxu0 0
    %1761 = vmatpush2.bf16.msra.mxu0 %v1677
    %1762 = vmatprep.subr.bf16.mxu0 0
    %1763 = vmatpush2.bf16.msra.mxu0 %v1676
    %1764 = vmatprep.mubr.bf16.mxu0 %v1438
    %1765 = vmatmul.mubr.bf16.gmra.mxu0 %v1437
    %v1766 = vpop.f32.mrf.mxu0
    %v1767 = vadd.f32 %v1538, %v1766
    %v1768 = vpop.f32.mrf.mxu0
    %v1769 = vpop.f32.mrf.mxu0
    %v1770 = vadd.f32 %v1538, %v1769
    %v1771 = vpop.f32.mrf.mxu0
    %1772 = vmatprep.mubr.bf16.mxu0 %v1442
    %1773 = vmatmul.mubr.bf16.gmra.mxu0 %v1441
    %v1774 = vpop.f32.mrf.mxu0
    %v1775 = vadd.f32 %v1538, %v1774
    %v1776 = vpop.f32.mrf.mxu0
    %v1777 = vpop.f32.mrf.mxu0
    %v1778 = vadd.f32 %v1538, %v1777
    %v1779 = vpop.f32.mrf.mxu0
    %1780 = vmatprep.mubr.bf16.mxu0 %v1446
    %1781 = vmatmul.mubr.bf16.gmra.mxu0 %v1445
    %v1782 = vpop.f32.mrf.mxu0
    %v1783 = vadd.f32 %v1538, %v1782
    %v1784 = vpop.f32.mrf.mxu0
    %v1785 = vpop.f32.mrf.mxu0
    %v1786 = vadd.f32 %v1538, %v1785
    %v1787 = vpop.f32.mrf.mxu0
    %1788 = vmatprep.mubr.bf16.mxu0 %v1450
    %1789 = vmatmul.mubr.bf16.gmra.mxu0 %v1449
    %v1790 = vpop.f32.mrf.mxu0
    %v1791 = vadd.f32 %v1538, %v1790
    %v1792 = vpop.f32.mrf.mxu0
    %v1793 = vpop.f32.mrf.mxu0
    %v1794 = vadd.f32 %v1538, %v1793
    %v1795 = vpop.f32.mrf.mxu0
    %1796 = vmatprep.mubr.bf16.mxu0 %v1454
    %1797 = vmatmul.mubr.bf16.gmra.mxu0 %v1453
    %v1798 = vpop.f32.mrf.mxu0
    %v1799 = vadd.f32 %v1538, %v1798
    %v1800 = vpop.f32.mrf.mxu0
    %v1801 = vpop.f32.mrf.mxu0
    %v1802 = vadd.f32 %v1538, %v1801
    %v1803 = vpop.f32.mrf.mxu0
    %1804 = vmatprep.mubr.bf16.mxu0 %v1458
    %1805 = vmatmul.mubr.bf16.gmra.mxu0 %v1457
    %v1806 = vpop.f32.mrf.mxu0
    %v1807 = vadd.f32 %v1538, %v1806
    %v1808 = vpop.f32.mrf.mxu0
    %v1809 = vpop.f32.mrf.mxu0
    %v1810 = vadd.f32 %v1538, %v1809
    %v1811 = vpop.f32.mrf.mxu0
    %1812 = vmatprep.mubr.bf16.mxu0 %v1462
    %1813 = vmatmul.mubr.bf16.gmra.mxu0 %v1461
    %v1814 = vpop.f32.mrf.mxu0
    %v1815 = vadd.f32 %v1538, %v1814
    %v1816 = vpop.f32.mrf.mxu0
    %v1817 = vpop.f32.mrf.mxu0
    %v1818 = vadd.f32 %v1538, %v1817
    %v1819 = vpop.f32.mrf.mxu0
    %1820 = vmatprep.mubr.bf16.mxu0 %v1466
    %1821 = vmatmul.mubr.bf16.gmra.mxu0 %v1465
    %v1822 = vpop.f32.mrf.mxu0
    %v1823 = vadd.f32 %v1538, %v1822
    %v1824 = vpop.f32.mrf.mxu0
    %v1825 = vpop.f32.mrf.mxu0
    %v1826 = vadd.f32 %v1538, %v1825
    %v1827 = vpop.f32.mrf.mxu0
    %1828 = vdwg.mxu0
    %1829 = vmatprep.subr.bf16.mxu0 0
    %1830 = vmatpush1.bf16.msra.mxu0 %v1691
    %1831 = vmatprep.subr.bf16.mxu0 0
    %1832 = vmatpush1.bf16.msra.mxu0 %v1690
    %1833 = vmatprep.subr.bf16.mxu0 0
    %1834 = vmatpush1.bf16.msra.mxu0 %v1689
    %1835 = vmatprep.subr.bf16.mxu0 0
    %1836 = vmatpush1.bf16.msra.mxu0 %v1688
    %1837 = vmatprep.subr.bf16.mxu0 0
    %1838 = vmatpush1.bf16.msra.mxu0 %v1687
    %1839 = vmatprep.subr.bf16.mxu0 0
    %1840 = vmatpush1.bf16.msra.mxu0 %v1686
    %1841 = vmatprep.subr.bf16.mxu0 0
    %1842 = vmatpush1.bf16.msra.mxu0 %v1685
    %1843 = vmatprep.subr.bf16.mxu0 0
    %1844 = vmatpush1.bf16.msra.mxu0 %v1684
    %1845 = vmatprep.subr.bf16.mxu0 0
    %1846 = vmatpush2.bf16.msra.mxu0 %v1699
    %1847 = vmatprep.subr.bf16.mxu0 0
    %1848 = vmatpush2.bf16.msra.mxu0 %v1698
    %1849 = vmatprep.subr.bf16.mxu0 0
    %1850 = vmatpush2.bf16.msra.mxu0 %v1697
    %1851 = vmatprep.subr.bf16.mxu0 0
    %1852 = vmatpush2.bf16.msra.mxu0 %v1696
    %1853 = vmatprep.subr.bf16.mxu0 0
    %1854 = vmatpush2.bf16.msra.mxu0 %v1695
    %1855 = vmatprep.subr.bf16.mxu0 0
    %1856 = vmatpush2.bf16.msra.mxu0 %v1694
    %1857 = vmatprep.subr.bf16.mxu0 0
    %1858 = vmatpush2.bf16.msra.mxu0 %v1693
    %1859 = vmatprep.subr.bf16.mxu0 0
    %1860 = vmatpush2.bf16.msra.mxu0 %v1692
    %1861 = vmatprep.mubr.bf16.mxu0 %v1440
    %1862 = vmatmul.mubr.bf16.gmra.mxu0 %v1439
    %v1863 = vpop.f32.mrf.mxu0
    %v1864 = vadd.f32 %v1767, %v1863
    %v1865 = vpop.f32.mrf.mxu0
    %v1866 = vpop.f32.mrf.mxu0
    %v1867 = vadd.f32 %v1770, %v1866
    %v1868 = vpop.f32.mrf.mxu0
    %1869 = vmatprep.mubr.bf16.mxu0 %v1444
    %1870 = vmatmul.mubr.bf16.gmra.mxu0 %v1443
    %v1871 = vpop.f32.mrf.mxu0
    %v1872 = vadd.f32 %v1775, %v1871
    %v1873 = vpop.f32.mrf.mxu0
    %v1874 = vpop.f32.mrf.mxu0
    %v1875 = vadd.f32 %v1778, %v1874
    %v1876 = vpop.f32.mrf.mxu0
    %1877 = vmatprep.mubr.bf16.mxu0 %v1448
    %1878 = vmatmul.mubr.bf16.gmra.mxu0 %v1447
    %v1879 = vpop.f32.mrf.mxu0
    %v1880 = vadd.f32 %v1783, %v1879
    %v1881 = vpop.f32.mrf.mxu0
    %v1882 = vpop.f32.mrf.mxu0
    %v1883 = vadd.f32 %v1786, %v1882
    %v1884 = vpop.f32.mrf.mxu0
    %1885 = vmatprep.mubr.bf16.mxu0 %v1452
    %1886 = vmatmul.mubr.bf16.gmra.mxu0 %v1451
    %v1887 = vpop.f32.mrf.mxu0
    %v1888 = vadd.f32 %v1791, %v1887
    %v1889 = vpop.f32.mrf.mxu0
    %v1890 = vpop.f32.mrf.mxu0
    %v1891 = vadd.f32 %v1794, %v1890
    %v1892 = vpop.f32.mrf.mxu0
    %1893 = vmatprep.mubr.bf16.mxu0 %v1456
    %1894 = vmatmul.mubr.bf16.gmra.mxu0 %v1455
    %v1895 = vpop.f32.mrf.mxu0
    %v1896 = vadd.f32 %v1799, %v1895
    %v1897 = vpop.f32.mrf.mxu0
    %v1898 = vpop.f32.mrf.mxu0
    %v1899 = vadd.f32 %v1802, %v1898
    %v1900 = vpop.f32.mrf.mxu0
    %1901 = vmatprep.mubr.bf16.mxu0 %v1460
    %1902 = vmatmul.mubr.bf16.gmra.mxu0 %v1459
    %v1903 = vpop.f32.mrf.mxu0
    %v1904 = vadd.f32 %v1807, %v1903
    %v1905 = vpop.f32.mrf.mxu0
    %v1906 = vpop.f32.mrf.mxu0
    %v1907 = vadd.f32 %v1810, %v1906
    %v1908 = vpop.f32.mrf.mxu0
    %1909 = vmatprep.mubr.bf16.mxu0 %v1464
    %1910 = vmatmul.mubr.bf16.gmra.mxu0 %v1463
    %v1911 = vpop.f32.mrf.mxu0
    %v1912 = vadd.f32 %v1815, %v1911
    %v1913 = vpop.f32.mrf.mxu0
    %v1914 = vpop.f32.mrf.mxu0
    %v1915 = vadd.f32 %v1818, %v1914
    %v1916 = vpop.f32.mrf.mxu0
    %1917 = vmatprep.mubr.bf16.mxu0 %v1468
    %1918 = vmatmul.mubr.bf16.gmra.mxu0 %v1467
    %v1919 = vpop.f32.mrf.mxu0
    %v1920 = vadd.f32 %v1823, %v1919
    %v1921 = vpop.f32.mrf.mxu0
    %v1922 = vpop.f32.mrf.mxu0
    %v1923 = vadd.f32 %v1826, %v1922
    %v1924 = vpop.f32.mrf.mxu0
    %1925 = vdwg.mxu0
    %v1926 = vpack.c.bf16 %v1867, %v1864
    %v1927 = vpack.c.bf16 %v1875, %v1872
    %v1928 = vpack.c.bf16 %v1883, %v1880
    %v1929 = vpack.c.bf16 %v1891, %v1888
    %v1930 = vpack.c.bf16 %v1899, %v1896
    %v1931 = vpack.c.bf16 %v1907, %v1904
    %v1932 = vpack.c.bf16 %v1915, %v1912
    %v1933 = vpack.c.bf16 %v1923, %v1920
    %v1942 = vunpack.c.l.b16 %v1926
    %v1943 = vunpack.c.h.b16 %v1926
    %v1944 = vunpack.c.l.b16 %v1927
    %v1945 = vunpack.c.h.b16 %v1927
    %v1946 = vunpack.c.l.b16 %v1928
    %v1947 = vunpack.c.h.b16 %v1928
    %v1948 = vunpack.c.l.b16 %v1929
    %v1949 = vunpack.c.h.b16 %v1929
    %v1950 = vunpack.c.l.b16 %v1930
    %v1951 = vunpack.c.h.b16 %v1930
    %v1952 = vunpack.c.l.b16 %v1931
    %v1953 = vunpack.c.h.b16 %v1931
    %v1954 = vunpack.c.l.b16 %v1932
    %v1955 = vunpack.c.h.b16 %v1932
    %v1956 = vunpack.c.l.b16 %v1933
    %v1957 = vunpack.c.h.b16 %v1933
    %v1958 = vpack.c.b16 %v1942, %v1942
    %v1959 = vpack.c.b16 %v1943, %v1943
    %v1960 = vpack.c.b16 %v1944, %v1944
    %v1961 = vpack.c.b16 %v1945, %v1945
    %v1962 = vpack.c.b16 %v1946, %v1946
    %v1963 = vpack.c.b16 %v1947, %v1947
    %v1964 = vpack.c.b16 %v1948, %v1948
    %v1965 = vpack.c.b16 %v1949, %v1949
    %v1966 = vpack.c.b16 %v1950, %v1950
    %v1967 = vpack.c.b16 %v1951, %v1951
    %v1968 = vpack.c.b16 %v1952, %v1952
    %v1969 = vpack.c.b16 %v1953, %v1953
    %v1970 = vpack.c.b16 %v1954, %v1954
    %v1971 = vpack.c.b16 %v1955, %v1955
    %v1972 = vpack.c.b16 %v1956, %v1956
    %v1973 = vpack.c.b16 %v1957, %v1957
    %1990 = vst [vmem:[%s5] sm:$0xf] %v1958
    %1991 = vst [vmem:[%s5 + $0x4] sm:$0xf] %v1959
    %1992 = vst [vmem:[%s5 + $0x8] sm:$0xf] %v1960
    %1993 = vst [vmem:[%s5 + $0xc] sm:$0xf] %v1961
    %1994 = vst [vmem:[%s5 + $0x10] sm:$0xf] %v1962
    %1995 = vst [vmem:[%s5 + $0x14] sm:$0xf] %v1963
    %1996 = vst [vmem:[%s5 + $0x18] sm:$0xf] %v1964
    %1997 = vst [vmem:[%s5 + $0x1c] sm:$0xf] %v1965
    %1998 = vst [vmem:[%s5 + $0x20] sm:$0xf] %v1966
    %1999 = vst [vmem:[%s5 + $0x24] sm:$0xf] %v1967
    %2000 = vst [vmem:[%s5 + $0x28] sm:$0xf] %v1968
    %2001 = vst [vmem:[%s5 + $0x2c] sm:$0xf] %v1969
    %2002 = vst [vmem:[%s5 + $0x30] sm:$0xf] %v1970
    %2003 = vst [vmem:[%s5 + $0x34] sm:$0xf] %v1971
    %2004 = vst [vmem:[%s5 + $0x38] sm:$0xf] %v1972
    %2005 = vst [vmem:[%s5 + $0x3c] sm:$0xf] %v1973
    // Predicated region
    $region26: #{discriminator_forward.1} parent=1 // pred_check
      _
    $region27: #{discriminator_forward.1} parent=1 // pred_check_branch
      %2007 = sbr.rel (0) target = $region29
    $region28: #{discriminator_forward.1} parent=1 // pred_region
      _
    $region29: #{discriminator_forward.1} parent=1 // pred_fallthru
      _
    // Predicated region
    $region30: #{discriminator_forward.1} parent=1 // pred_check
      _
    $region31: #{discriminator_forward.1} parent=1 // pred_check_branch
      %2009 = sbr.rel (0) target = $region33
    $region32: #{discriminator_forward.1} parent=1 // pred_region
      _
    $region33: #{discriminator_forward.1} parent=1 // pred_fallthru
      _
    %2010 = vsyncpa [#allocation3], 1

</llo_original>
